<compile_context>
chip_gen: v7x
topology: tpu7x:2x2x1
jax: 0.10.0
libtpu: 0.0.40
codegen_flags: <defaults>
</compile_context>

<pallas_src>
import functools
import math

import jax
import jax.numpy as jnp
import numpy as np
from jax.experimental import pallas as pl
from jax.experimental.pallas import tpu as pltpu


# ----------------------------------------------------------------------------
# Generation-aware config (VMEM budget + default tiles).
# ----------------------------------------------------------------------------
def _tpu_config():
    vmem_bytes = 64 * 1024 * 1024
    try:
        vmem_bytes = int(pltpu.get_tpu_info().vmem_capacity_bytes)
    except Exception:
        pass
    if vmem_bytes >= 100 * 1024 * 1024:
        # v5e / v6e: 128 MiB VMEM per core -> big weight chunks, deep buffers.
        return {"vmem_limit": 100 * 1024 * 1024, "tT": 256, "tK_target": 512}
    # v7x: 64 MiB per core -> keep double-buffered weight chunks moderate.
    return {"vmem_limit": 48 * 1024 * 1024, "tT": 256, "tK_target": 256}


# ----------------------------------------------------------------------------
# Pallas kernel: fused GLU expert MLP, k-chunked, expert chosen per token tile.
# ----------------------------------------------------------------------------
def _moe_glu_kernel(tile_expert_ref, tile_valid_ref,   # scalar prefetch (SMEM)
                    x_ref, s_ref,                      # activations, scores
                    wg_ref, wu_ref, wd_ref,            # bf16 weight chunks
                    bg_ref, bu_ref, bd_ref,            # f32 biases (full rows)
                    o_ref,                             # bf16 output tile
                    acc_ref,                           # f32 VMEM accumulator
                    *, tK):
    ti = pl.program_id(0)
    ki = pl.program_id(1)

    @pl.when(ki == 0)
    def _():
        acc_ref[...] = jnp.zeros_like(acc_ref)

    # Skip MXU work on pure-padding trailing tiles (weight DMA still happens).
    @pl.when(tile_valid_ref[ti] != 0)
    def _():
        off = pl.multiple_of(ki * tK, tK)
        x = x_ref[...]                                        # (tT, in_f) bf16
        bg = bg_ref[:, pl.ds(off, tK)]                        # (1, tK) f32
        bu = bu_ref[:, pl.ds(off, tK)]
        gate = jnp.dot(x, wg_ref[...],
                       preferred_element_type=jnp.float32) + bg
        gate = gate * jax.nn.sigmoid(gate)                    # SiLU in f32
        up = jnp.dot(x, wu_ref[...],
                     preferred_element_type=jnp.float32) + bu
        h = (gate * up).astype(wd_ref.dtype)                  # bf16 for MXU
        acc_ref[...] += jnp.dot(h, wd_ref[...],
                                preferred_element_type=jnp.float32)

    @pl.when(ki == pl.num_programs(1) - 1)
    def _():
        o_ref[...] = ((acc_ref[...] + bd_ref[...]) * s_ref[...]).astype(o_ref.dtype)


# ----------------------------------------------------------------------------
# Wrapper: routing (sort / group-pad / gather) -> kernel -> combine (f32 add)
# ----------------------------------------------------------------------------
def universal_calculator_forward(x, topk_indices, topk_scores, params,
                                 score_scale_factor=1.0, tT=None, tK=None):
    wg, wu, wd, bg, bu, bd = params
    E, in_f, size_e = wg.shape
    out_f = wd.shape[-1]

    cfg = _tpu_config()
    if tT is None:
        tT = cfg["tT"]
    if tK is None:
        tK = math.gcd(cfg["tK_target"], size_e)   # largest aligned divisor
    assert in_f % 128 == 0 and out_f % 128 == 0, "feature dims must be 128-aligned"
    assert size_e % 128 == 0 and size_e % tK == 0, "size_expert must be 128-aligned"

    B, num_sel = topk_indices.shape
    N = B * num_sel

    # ---- dispatch: sort assignments by expert, pad each group to tile size --
    flat_e = topk_indices.reshape(-1).astype(jnp.int32)
    flat_s = topk_scores.reshape(-1).astype(jnp.float32)
    batch_idx = jnp.repeat(jnp.arange(B, dtype=jnp.int32), num_sel)

    order = jnp.argsort(flat_e)
    sorted_e = flat_e[order]
    sorted_s = flat_s[order]
    sorted_b = batch_idx[order]

    group_sizes = jnp.bincount(flat_e, length=E)                  # (E,)
    group_start = jnp.cumsum(group_sizes) - group_sizes
    padded_sizes = ((group_sizes + tT - 1) // tT) * tT
    padded_end = jnp.cumsum(padded_sizes)
    padded_start = padded_end - padded_sizes

    rank = jnp.arange(N, dtype=jnp.int32) - group_start[sorted_e]
    dest = (padded_start[sorted_e] + rank).astype(jnp.int32)      # (N,)

    num_tiles = N // tT + min(E, N)                               # static bound
    T_pad = num_tiles * tT

    tile_start = jnp.arange(num_tiles, dtype=jnp.int32) * tT
    tile_expert = jnp.searchsorted(padded_end, tile_start, side="right")
    tile_expert = jnp.minimum(tile_expert, E - 1).astype(jnp.int32)
    tile_valid = (tile_start < padded_end[-1]).astype(jnp.int32)

    # Single gather builds x_pad; padding rows point at row 0 (never read back).
    src_row = jnp.zeros((T_pad,), jnp.int32).at[dest].set(sorted_b)
    x_pad = jnp.take(x.astype(jnp.bfloat16), src_row, axis=0)     # (T_pad, in_f)
    s_pad = jnp.zeros((T_pad, 1), jnp.float32).at[dest].set(
        (sorted_s * score_scale_factor)[:, None])

    # ---- expert compute: one pipelined pallas_call ---------------------------
    kernel = functools.partial(_moe_glu_kernel, tK=tK)
    out_pad = pl.pallas_call(
        kernel,
        out_shape=jax.ShapeDtypeStruct((T_pad, out_f), jnp.bfloat16),
        grid_spec=pltpu.PrefetchScalarGridSpec(
            num_scalar_prefetch=2,
            grid=(num_tiles, size_e // tK),
            in_specs=[
                # x: resident across the k axis (no re-DMA per k step)
                pl.BlockSpec((tT, in_f), lambda ti, ki, te, tv: (ti, 0)),
                # per-token routing score (already scaled)
                pl.BlockSpec((tT, 1), lambda ti, ki, te, tv: (ti, 0)),
                # weight chunks, expert chosen via scalar-prefetched tile_expert
                pl.BlockSpec((None, in_f, tK), lambda ti, ki, te, tv: (te[ti], 0, ki)),
                pl.BlockSpec((None, in_f, tK), lambda ti, ki, te, tv: (te[ti], 0, ki)),
                pl.BlockSpec((None, tK, out_f), lambda ti, ki, te, tv: (te[ti], ki, 0)),
                # biases: one full-width block per tile, sliced in-kernel
                pl.BlockSpec((None, 1, size_e), lambda ti, ki, te, tv: (te[ti], 0, 0)),
                pl.BlockSpec((None, 1, size_e), lambda ti, ki, te, tv: (te[ti], 0, 0)),
                pl.BlockSpec((None, 1, out_f), lambda ti, ki, te, tv: (te[ti], 0, 0)),
            ],
            out_specs=pl.BlockSpec((tT, out_f), lambda ti, ki, te, tv: (ti, 0)),
            scratch_shapes=[pltpu.VMEM((tT, out_f), jnp.float32)],
        ),
        compiler_params=pltpu.CompilerParams(
            dimension_semantics=("parallel", "arbitrary"),
            vmem_limit_bytes=cfg["vmem_limit"],
        ),
    )(tile_expert, tile_valid, x_pad, s_pad, wg, wu, wd, bg, bu, bd)

    # ---- combine: gather real rows, sum over the K selections in f32 --------
    expert_out = out_pad[dest].astype(jnp.float32)                # (N, out_f)
    y = jnp.zeros((B, out_f), jnp.float32).at[sorted_b].add(expert_out)
    return y.astype(x.dtype)


# ----------------------------------------------------------------------------
# Parameter init mirroring LinearGLUExperts.reset_parameters()
# (kaiming_uniform(a=sqrt(5)) == U(-1/sqrt(fan_in), 1/sqrt(fan_in)))
# Weights stored stacked & pre-transposed; streamed as bf16; biases f32.
# ----------------------------------------------------------------------------
def init_params(key, num_experts, in_features, size_expert, out_features):
    ks = jax.random.split(key, 6)
    bnd_in = 1.0 / math.sqrt(in_features)
    bnd_h = 1.0 / math.sqrt(size_expert)
    wg = jax.random.uniform(ks[0], (num_experts, in_features, size_expert),
                            jnp.float32, -bnd_in, bnd_in).astype(jnp.bfloat16)
    wu = jax.random.uniform(ks[1], (num_experts, in_features, size_expert),
                            jnp.float32, -bnd_in, bnd_in).astype(jnp.bfloat16)
    wd = jax.random.uniform(ks[2], (num_experts, size_expert, out_features),
                            jnp.float32, -bnd_h, bnd_h).astype(jnp.bfloat16)
    bg = jax.random.uniform(ks[3], (num_experts, 1, size_expert),
                            jnp.float32, -bnd_in, bnd_in)
    bu = jax.random.uniform(ks[4], (num_experts, 1, size_expert),
                            jnp.float32, -bnd_in, bnd_in)
    bd = jax.random.uniform(ks[5], (num_experts, 1, out_features),
                            jnp.float32, -bnd_h, bnd_h)
    return wg, wu, wd, bg, bu, bd


# ----------------------------------------------------------------------------
# Pure-JAX f32 reference for UniversalCalculator.forward
# ----------------------------------------------------------------------------
def reference_forward(x, topk_indices, topk_scores, params, score_scale_factor=1.0):
    wg, wu, wd, bg, bu, bd = params
    xf = x.astype(jnp.float32)
    wgf, wuf, wdf = (w.astype(jnp.float32) for w in (wg, wu, wd))
    gate = jax.nn.silu(jnp.einsum("ti,eih->eth", xf, wgf) + bg)
    up = jnp.einsum("ti,eih->eth", xf, wuf) + bu
    down = jnp.einsum("eth,eho->eto", gate * up, wdf) + bd        # (E, T, out)
    B, _ = topk_indices.shape
    sel = down[topk_indices, jnp.arange(B)[:, None]]              # (B, K, out)
    w = (topk_scores.astype(jnp.float32) * score_scale_factor)[..., None]
    return jnp.sum(sel * w, axis=1).astype(x.dtype)


if __name__ == "__main__":
    # Small but TPU-aligned shapes: 128-lane feature dims.
    num_experts = 4
    in_features = 128
    size_expert = 256          # hidden_features = 4 * 256 = 1024
    out_features = 128
    batch_tokens = 16
    num_selects = 2
    score_scale_factor = 1.0

    key = jax.random.PRNGKey(0)
    k_par, k_x, k_idx, k_sc = jax.random.split(key, 4)
    params = init_params(k_par, num_experts, in_features, size_expert, out_features)
    x = jax.random.normal(k_x, (batch_tokens, in_features), dtype=jnp.float32)
    topk_indices = jax.random.randint(k_idx, (batch_tokens, num_selects),
                                      0, num_experts, dtype=jnp.int32)
    topk_scores = jax.nn.softmax(
        jax.random.normal(k_sc, (batch_tokens, num_selects), dtype=jnp.float32),
        axis=-1)

    y = universal_calculator_forward(x, topk_indices, topk_scores, params,
                                     score_scale_factor=score_scale_factor)
    y = jax.block_until_ready(y)

    y_ref = reference_forward(x, topk_indices, topk_scores, params,
                              score_scale_factor)
    # bf16 weight/activation streaming vs. f32 reference -> loose tolerance by design.
    np.testing.assert_allclose(np.asarray(y), np.asarray(y_ref),
                               rtol=2e-2, atol=2e-2)
    print("KERNEL_OK")
</pallas_src>

<mosaic_0001>
module attributes {stable_mosaic.version = 11 : i64} {
  func.func @_moe_glu_kernel(%arg0: i32, %arg1: i32, %arg2: memref<4xi32, #tpu.memory_space<smem>>, %arg3: memref<4xi32, #tpu.memory_space<smem>>, %arg4: memref<256x128xbf16, #tpu.memory_space<vmem>>, %arg5: memref<256x1xf32, #tpu.memory_space<vmem>>, %arg6: memref<1x128x256xbf16, #tpu.memory_space<vmem>>, %arg7: memref<1x128x256xbf16, #tpu.memory_space<vmem>>, %arg8: memref<1x256x128xbf16, #tpu.memory_space<vmem>>, %arg9: memref<1x1x256xf32, #tpu.memory_space<vmem>>, %arg10: memref<1x1x256xf32, #tpu.memory_space<vmem>>, %arg11: memref<1x1x128xf32, #tpu.memory_space<vmem>>, %arg12: memref<256x128xbf16, #tpu.memory_space<vmem>>, %arg13: memref<256x128xf32, #tpu.memory_space<vmem>>) attributes {dimension_semantics = [#tpu.dimension_semantics<parallel>, #tpu.dimension_semantics<arbitrary>], iteration_bounds = array<i64: 4, 1>, scalar_prefetch = 2 : i64, scratch_operands = 1 : i64, tpu.core_type = #tpu.core_type<tc>, window_params = [{transform_indices = @transform_0, window_bounds = array<i64: 256, 128>}, {transform_indices = @transform_1, window_bounds = array<i64: 256, 1>}, {transform_indices = @transform_2, window_bounds = array<i64: 1, 128, 256>}, {transform_indices = @transform_3, window_bounds = array<i64: 1, 128, 256>}, {transform_indices = @transform_4, window_bounds = array<i64: 1, 256, 128>}, {transform_indices = @transform_5, window_bounds = array<i64: 1, 1, 256>}, {transform_indices = @transform_6, window_bounds = array<i64: 1, 1, 256>}, {transform_indices = @transform_7, window_bounds = array<i64: 1, 1, 128>}, {transform_indices = @transform_8, window_bounds = array<i64: 256, 128>}]} {
    %c0_i32 = arith.constant 0 : i32
    %0 = arith.cmpi eq, %arg1, %c0_i32 : i32
    %1 = arith.extui %0 : i1 to i32
    %c0_i32_0 = arith.constant 0 : i32
    %2 = arith.cmpi ne, %1, %c0_i32_0 : i32
    scf.if %2 {
      %cst = arith.constant 0.000000e+00 : f32
      %11 = vector.broadcast %cst : f32 to vector<256x128xf32>
      %c0 = arith.constant 0 : index
      %c0_5 = arith.constant 0 : index
      %12 = vector.load %arg13[%c0, %c0_5] : memref<256x128xf32, #tpu.memory_space<vmem>>, vector<256x128xf32>
      tpu.vector_store %arg13[%c0, %c0_5], %11 {strides = array<i32>} : memref<256x128xf32, #tpu.memory_space<vmem>>, vector<256x128xf32>,
    } else {
    }
    %3 = arith.index_cast %arg0 : i32 to index
    %4 = memref.load %arg3[%3] : memref<4xi32, #tpu.memory_space<smem>>
    %c0_i32_1 = arith.constant 0 : i32
    %5 = arith.cmpi ne, %4, %c0_i32_1 : i32
    %6 = arith.extui %5 : i1 to i32
    %c0_i32_2 = arith.constant 0 : i32
    %7 = arith.cmpi ne, %6, %c0_i32_2 : i32
    scf.if %7 {
      %c256_i32 = arith.constant 256 : i32
      %11 = arith.muli %arg1, %c256_i32 : i32
      %12 = tpu.assume_multiple %11, 256 : i32
      %c0 = arith.constant 0 : index
      %c0_5 = arith.constant 0 : index
      %13 = vector.load %arg4[%c0, %c0_5] : memref<256x128xbf16, #tpu.memory_space<vmem>>, vector<256x128xbf16>
      %c0_6 = arith.constant 0 : index
      %c0_7 = arith.constant 0 : index
      %14 = arith.index_cast %12 : i32 to index
      %15 = vector.load %arg9[%c0_6, %c0_7, %14] : memref<1x1x256xf32, #tpu.memory_space<vmem>>, vector<1x1x256xf32>
      %16 = vector.shape_cast %15 : vector<1x1x256xf32> to vector<1x256xf32>
      %c0_8 = arith.constant 0 : index
      %c0_9 = arith.constant 0 : index
      %17 = arith.index_cast %12 : i32 to index
      %18 = vector.load %arg10[%c0_8, %c0_9, %17] : memref<1x1x256xf32, #tpu.memory_space<vmem>>, vector<1x1x256xf32>
      %19 = vector.shape_cast %18 : vector<1x1x256xf32> to vector<1x256xf32>
      %c0_10 = arith.constant 0 : index
      %c0_11 = arith.constant 0 : index
      %c0_12 = arith.constant 0 : index
      %20 = vector.load %arg6[%c0_10, %c0_11, %c0_12] : memref<1x128x256xbf16, #tpu.memory_space<vmem>>, vector<1x128x256xbf16>
      %21 = vector.shape_cast %20 : vector<1x128x256xbf16> to vector<128x256xbf16>
      %cst = arith.constant dense<0.000000e+00> : vector<256x256xf32>
      %22 = tpu.matmul %13, %21, %cst {dimension_numbers = #tpu.dot_dimension_numbers<[1], [0], [0], [1], [0, 0, 1, 1], [], []>} : vector<256x128xbf16>, vector<128x256xbf16>, vector<256x256xf32> -> vector<256x256xf32>
      %23 = vector.broadcast %16 : vector<1x256xf32> to vector<256x256xf32>
      %24 = arith.addf %22, %23 : vector<256x256xf32>
      %25 = arith.negf %24 : vector<256x256xf32>
      %26 = math.exp %25 : vector<256x256xf32>
      %cst_13 = arith.constant 1.000000e+00 : f32
      %27 = vector.broadcast %cst_13 : f32 to vector<256x256xf32>
      %28 = arith.addf %27, %26 : vector<256x256xf32>
      %29 = arith.divf %27, %28 : vector<256x256xf32>
      %30 = arith.mulf %24, %29 : vector<256x256xf32>
      %c0_14 = arith.constant 0 : index
      %c0_15 = arith.constant 0 : index
      %c0_16 = arith.constant 0 : index
      %31 = vector.load %arg7[%c0_14, %c0_15, %c0_16] : memref<1x128x256xbf16, #tpu.memory_space<vmem>>, vector<1x128x256xbf16>
      %32 = vector.shape_cast %31 : vector<1x128x256xbf16> to vector<128x256xbf16>
      %cst_17 = arith.constant dense<0.000000e+00> : vector<256x256xf32>
      %33 = tpu.matmul %13, %32, %cst_17 {dimension_numbers = #tpu.dot_dimension_numbers<[1], [0], [0], [1], [0, 0, 1, 1], [], []>} : vector<256x128xbf16>, vector<128x256xbf16>, vector<256x256xf32> -> vector<256x256xf32>
      %34 = vector.broadcast %19 : vector<1x256xf32> to vector<256x256xf32>
      %35 = arith.addf %33, %34 : vector<256x256xf32>
      %36 = arith.mulf %30, %35 : vector<256x256xf32>
      %37 = arith.truncf %36 : vector<256x256xf32> to vector<256x256xbf16>
      %c0_18 = arith.constant 0 : index
      %c0_19 = arith.constant 0 : index
      %38 = vector.load %arg13[%c0_18, %c0_19] : memref<256x128xf32, #tpu.memory_space<vmem>>, vector<256x128xf32>
      %c0_20 = arith.constant 0 : index
      %c0_21 = arith.constant 0 : index
      %c0_22 = arith.constant 0 : index
      %39 = vector.load %arg8[%c0_20, %c0_21, %c0_22] : memref<1x256x128xbf16, #tpu.memory_space<vmem>>, vector<1x256x128xbf16>
      %40 = vector.shape_cast %39 : vector<1x256x128xbf16> to vector<256x128xbf16>
      %cst_23 = arith.constant dense<0.000000e+00> : vector<256x128xf32>
      %41 = tpu.matmul %37, %40, %cst_23 {dimension_numbers = #tpu.dot_dimension_numbers<[1], [0], [0], [1], [0, 0, 1, 1], [], []>} : vector<256x256xbf16>, vector<256x128xbf16>, vector<256x128xf32> -> vector<256x128xf32>
      %42 = arith.addf %38, %41 : vector<256x128xf32>
      %c0_24 = arith.constant 0 : index
      %c0_25 = arith.constant 0 : index
      %43 = vector.load %arg13[%c0_24, %c0_25] : memref<256x128xf32, #tpu.memory_space<vmem>>, vector<256x128xf32>
      tpu.vector_store %arg13[%c0_24, %c0_25], %42 {strides = array<i32>} : memref<256x128xf32, #tpu.memory_space<vmem>>, vector<256x128xf32>,
    } else {
    }
    %c0_i32_3 = arith.constant 0 : i32
    %8 = arith.cmpi eq, %arg1, %c0_i32_3 : i32
    %9 = arith.extui %8 : i1 to i32
    %c0_i32_4 = arith.constant 0 : i32
    %10 = arith.cmpi ne, %9, %c0_i32_4 : i32
    scf.if %10 {
      %c0 = arith.constant 0 : index
      %c0_5 = arith.constant 0 : index
      %11 = vector.load %arg13[%c0, %c0_5] : memref<256x128xf32, #tpu.memory_space<vmem>>, vector<256x128xf32>
      %c0_6 = arith.constant 0 : index
      %c0_7 = arith.constant 0 : index
      %c0_8 = arith.constant 0 : index
      %12 = vector.load %arg11[%c0_6, %c0_7, %c0_8] : memref<1x1x128xf32, #tpu.memory_space<vmem>>, vector<1x1x128xf32>
      %13 = vector.shape_cast %12 : vector<1x1x128xf32> to vector<1x128xf32>
      %14 = vector.broadcast %13 : vector<1x128xf32> to vector<256x128xf32>
      %15 = arith.addf %11, %14 : vector<256x128xf32>
      %c0_9 = arith.constant 0 : index
      %c0_10 = arith.constant 0 : index
      %16 = vector.load %arg5[%c0_9, %c0_10] : memref<256x1xf32, #tpu.memory_space<vmem>>, vector<256x1xf32>
      %17 = vector.broadcast %16 : vector<256x1xf32> to vector<256x128xf32>
      %18 = arith.mulf %15, %17 : vector<256x128xf32>
      %19 = arith.truncf %18 : vector<256x128xf32> to vector<256x128xbf16>
      %c0_11 = arith.constant 0 : index
      %c0_12 = arith.constant 0 : index
      %20 = vector.load %arg12[%c0_11, %c0_12] : memref<256x128xbf16, #tpu.memory_space<vmem>>, vector<256x128xbf16>
      tpu.vector_store %arg12[%c0_11, %c0_12], %19 {strides = array<i32>} : memref<256x128xbf16, #tpu.memory_space<vmem>>, vector<256x128xbf16>,
    } else {
    }
    return
  }
  func.func @transform_0(%arg0: i32, %arg1: i32, %arg2: memref<4xi32, #tpu.memory_space<smem>>, %arg3: memref<4xi32, #tpu.memory_space<smem>>) -> (i32, i32) {
    %c0_i32 = arith.constant 0 : i32
    %c0_i32_0 = arith.constant 0 : i32
    return %arg0, %c0_i32 : i32, i32
  }
  func.func @transform_1(%arg0: i32, %arg1: i32, %arg2: memref<4xi32, #tpu.memory_space<smem>>, %arg3: memref<4xi32, #tpu.memory_space<smem>>) -> (i32, i32) {
    %c0_i32 = arith.constant 0 : i32
    %c0_i32_0 = arith.constant 0 : i32
    return %arg0, %c0_i32 : i32, i32
  }
  func.func @transform_2(%arg0: i32, %arg1: i32, %arg2: memref<4xi32, #tpu.memory_space<smem>>, %arg3: memref<4xi32, #tpu.memory_space<smem>>) -> (i32, i32, i32) {
    %0 = arith.index_cast %arg0 : i32 to index
    %1 = memref.load %arg2[%0] : memref<4xi32, #tpu.memory_space<smem>>
    %c0_i32 = arith.constant 0 : i32
    %c0_i32_0 = arith.constant 0 : i32
    return %1, %c0_i32, %arg1 : i32, i32, i32
  }
  func.func @transform_3(%arg0: i32, %arg1: i32, %arg2: memref<4xi32, #tpu.memory_space<smem>>, %arg3: memref<4xi32, #tpu.memory_space<smem>>) -> (i32, i32, i32) {
    %0 = arith.index_cast %arg0 : i32 to index
    %1 = memref.load %arg2[%0] : memref<4xi32, #tpu.memory_space<smem>>
    %c0_i32 = arith.constant 0 : i32
    %c0_i32_0 = arith.constant 0 : i32
    return %1, %c0_i32, %arg1 : i32, i32, i32
  }
  func.func @transform_4(%arg0: i32, %arg1: i32, %arg2: memref<4xi32, #tpu.memory_space<smem>>, %arg3: memref<4xi32, #tpu.memory_space<smem>>) -> (i32, i32, i32) {
    %0 = arith.index_cast %arg0 : i32 to index
    %1 = memref.load %arg2[%0] : memref<4xi32, #tpu.memory_space<smem>>
    %c0_i32 = arith.constant 0 : i32
    %c0_i32_0 = arith.constant 0 : i32
    return %1, %arg1, %c0_i32 : i32, i32, i32
  }
  func.func @transform_5(%arg0: i32, %arg1: i32, %arg2: memref<4xi32, #tpu.memory_space<smem>>, %arg3: memref<4xi32, #tpu.memory_space<smem>>) -> (i32, i32, i32) {
    %0 = arith.index_cast %arg0 : i32 to index
    %1 = memref.load %arg2[%0] : memref<4xi32, #tpu.memory_space<smem>>
    %c0_i32 = arith.constant 0 : i32
    %c0_i32_0 = arith.constant 0 : i32
    %c0_i32_1 = arith.constant 0 : i32
    return %1, %c0_i32, %c0_i32_0 : i32, i32, i32
  }
  func.func @transform_6(%arg0: i32, %arg1: i32, %arg2: memref<4xi32, #tpu.memory_space<smem>>, %arg3: memref<4xi32, #tpu.memory_space<smem>>) -> (i32, i32, i32) {
    %0 = arith.index_cast %arg0 : i32 to index
    %1 = memref.load %arg2[%0] : memref<4xi32, #tpu.memory_space<smem>>
    %c0_i32 = arith.constant 0 : i32
    %c0_i32_0 = arith.constant 0 : i32
    %c0_i32_1 = arith.constant 0 : i32
    return %1, %c0_i32, %c0_i32_0 : i32, i32, i32
  }
  func.func @transform_7(%arg0: i32, %arg1: i32, %arg2: memref<4xi32, #tpu.memory_space<smem>>, %arg3: memref<4xi32, #tpu.memory_space<smem>>) -> (i32, i32, i32) {
    %0 = arith.index_cast %arg0 : i32 to index
    %1 = memref.load %arg2[%0] : memref<4xi32, #tpu.memory_space<smem>>
    %c0_i32 = arith.constant 0 : i32
    %c0_i32_0 = arith.constant 0 : i32
    %c0_i32_1 = arith.constant 0 : i32
    return %1, %c0_i32, %c0_i32_0 : i32, i32, i32
  }
  func.func @transform_8(%arg0: i32, %arg1: i32, %arg2: memref<4xi32, #tpu.memory_space<smem>>, %arg3: memref<4xi32, #tpu.memory_space<smem>>) -> (i32, i32) {
    %c0_i32 = arith.constant 0 : i32
    %c0_i32_0 = arith.constant 0 : i32
    return %arg0, %c0_i32 : i32, i32
  }
}

</mosaic_0001>

<llo_original>
// kernel: tpu_custom_call.1
$region0: #{tpu_custom_call.1}
  #allocation0 [shape = 'u32[]', space=smem, size = 0x4, offset = 0x4, fixed_abs, tag = 'smem constant byte address 0x4 - core index']
  #allocation1 [shape = 'u32[144,128]{1,0:T(1,128)}', space=vmem, size = 0x12000, scoped, tag = 'internal scratch']
  #allocation2 [shape = 'f32[256,128]{1,0:T(8,128)}', space=vmem, size = 0x20000, scoped, tag = 'scratch operand']
  #allocation3 [shape = 's32[1]{0}', space=sflag, size = 0x4, scoped, tag = 'scoped memory for tpu_custom_call.1']
  #allocation4 [shape = 'u8[512]{0}', space=smem, size = 0x200, scoped, tag = 'prefetched SMEM operand 0']
  #allocation5 [shape = 'u8[512]{0}', space=smem, size = 0x200, scoped, tag = 'prefetched SMEM operand 1']
  %s0 = inlined_call_operand.hbm [shape: s32[4], index: 0, kind: input, shape index: {}]
  %s1 = inlined_call_operand.hbm [shape: s32[4], index: 1, kind: input, shape index: {}]
  %s2 = inlined_call_operand.vmem [shape: bf16[1024,128], index: 2, kind: input, shape index: {}]
  %s3 = inlined_call_operand.vmem [shape: f32[1024,1], index: 3, kind: input, shape index: {}]
  %s4 = inlined_call_operand.vmem [shape: bf16[4,128,256], index: 4, kind: input, shape index: {}]
  %s5 = inlined_call_operand.hbm [shape: bf16[4,128,256], index: 5, kind: input, shape index: {}]
  %s6 = inlined_call_operand.hbm [shape: bf16[4,256,128], index: 6, kind: input, shape index: {}]
  %s7 = inlined_call_operand.vmem [shape: f32[4,1,256], index: 7, kind: input, shape index: {}]
  %s8 = inlined_call_operand.vmem [shape: f32[4,1,256], index: 8, kind: input, shape index: {}]
  %s9 = inlined_call_operand.vmem [shape: f32[4,1,128], index: 9, kind: input, shape index: {}]
  %s10 = inlined_call_operand.hbm [shape: bf16[1024,128], index: 10, kind: output, shape index: {}]
  %s11 = sld [smem:[#allocation0]]
  $region85: #{tpu_custom_call.1} parent=0
    _
  %s13 = ssub.s32 1, %s11
  %s14 = scalar_select 0, %s13, %s11
  %16 = dma.hbm_to_smem %s0, 16, [#allocation4], [#allocation3]
  %18 = dma.hbm_to_smem %s1, 16, [#allocation5], [#allocation3]
  %19 = dma.done [#allocation3], 32
  %20 = sfence
  $region1: #{tpu_custom_call.1} parent=0
    #allocation6 [shape = 'u8[131072]{0}', space=vmem, size = 0x20000, scoped, tag = 'input window, operand 5']
    #allocation7 [shape = 's32[2]{0}', space=sflag, size = 0x8, scoped, tag = 'scoped memory for tpu_custom_call.1']
    #allocation8 [shape = 's32[2]{0}', space=sflag, size = 0x8, scoped, tag = 'scoped memory for tpu_custom_call.1']
    #allocation9 [shape = 'u8[131072]{0}', space=vmem, size = 0x20000, scoped, tag = 'input window, operand 6']
    #allocation10 [shape = 's32[2]{0}', space=sflag, size = 0x8, scoped, tag = 'scoped memory for tpu_custom_call.1']
    #allocation11 [shape = 'u8[131072]{0}', space=vmem, size = 0x20000, scoped, tag = 'output window, operand 0']
    %21 = vsyncpa [#allocation7], 0
    %s22 = scalar_lea.sflag [#allocation7], 1
    %23 = vsyncpa %s22, 0
    %24 = vsyncpa [#allocation10], 0
    %s25 = scalar_lea.sflag [#allocation10], 1
    %26 = vsyncpa %s25, 0
    %27 = vsyncpa [#allocation8], 0
    %s28 = scalar_lea.sflag [#allocation8], 1
    %29 = vsyncpa %s28, 0
    loop: start=0, step=1, limit=6
    $region2: #{tpu_custom_call.1} parent=1 // loop_pre_header
      _
    $region3: #{tpu_custom_call.1} parent=1 // loop_header
      %s31 = sphi 0, %s35
      %p32 = scmp.ge.s32.totalorder %s31, 6
      %s38 = sphi 0, %s50
      %s39 = sphi 0, %s46
      %s40 = sphi 0, %s38
      %s41 = sphi 0, %s39
      %s42 = sphi 0, %s40
      %s43 = sphi 0, %s41
      %s53 = sphi 0, %s55
      %s56 = sphi 0, %s53
      %s57 = sphi 0, %s56
      %s73 = sphi 0, %s57
      %s79 = sphi 0, %s81
      %s82 = sphi 0, %s79
      %s83 = sphi 0, %s82
      %s99 = sphi 0, %s83
      %s109 = sphi 0, %s111
      %s112 = sphi 0, %s109
      %s113 = sphi 0, %s112
      %s129 = sphi 0, %s113
      %s139 = sphi 0, %s141
      %s142 = sphi 0, %s139
      %s143 = sphi 0, %s142
      %s159 = sphi 0, %s143
      %s169 = sphi 0, %s171
      %s172 = sphi 0, %s169
      %s173 = sphi 0, %s172
      %s189 = sphi 0, %s173
      %s197 = sphi 0, %s199
      %s200 = sphi 0, %s197
      %s201 = sphi 0, %s200
      %s217 = sphi 0, %s201
      %s225 = sphi 0, %s227
      %s228 = sphi 0, %s225
      %s229 = sphi 0, %s228
      %s245 = sphi 0, %s229
      %s253 = sphi 0, %s255
      %s256 = sphi 0, %s253
      %s257 = sphi 0, %s256
      %s273 = sphi 0, %s257
      %s279 = sphi 0, %s281
      %s282 = sphi 0, %s279
      %s283 = sphi 0, %s282
      %s299 = sphi 0, %s283
    $region4: #{tpu_custom_call.1} parent=1 // loop_header_branch
      %34 = sbr.rel (%p32) target = $region8
    $region5: #{tpu_custom_call.1} parent=1 // loop_body
      %s36 = ssub.s32 %s31, 1
      %s37 = ssub.s32 %s31, 2
      %s44 = sadd.s32 1, %s39
      %p45 = scmp.ge.s32.totalorder %s44, 1
      %s46 = scalar_select %p45, 0, %s44
      %s47 = sadd.s32 1, %s38
      %s48 = scalar_select %p45, %s47, %s38
      %p49 = scmp.ge.s32.totalorder %s48, 4
      %s50 = scalar_select %p49, 0, %s48
      %s51 = ssub.s32 %s38, %s50
      %p52 = scmp.eq.s32.totalorder %s51, 0
      %s54 = sadd.s32 %s53, 1
      %s55 = scalar_select %p52, %s53, %s54
      %p58 = pneg %p52
      %p59 = scmp.eq.s32.totalorder %s31, 3
      %p60 = por %p58, %p59
      %p61 = scmp.ne.s32.totalorder %s53, %s56
      %p62 = scmp.eq.s32.totalorder %s31, 0
      %p63 = por %p61, %p62
      %p64 = scmp.ne.s32.totalorder %s53, %s56
      %p65 = scmp.eq.s32.totalorder %s36, 3
      %p66 = por %p64, %p65
      %p67 = scmp.ne.s32.totalorder %s56, %s57
      %p68 = scmp.eq.s32.totalorder %s36, 0
      %p69 = por %p67, %p68
      %p70 = scmp.ne.s32.totalorder %s56, %s57
      %p71 = scmp.eq.s32.totalorder %s37, 3
      %p72 = por %p70, %p71
      %p74 = scmp.ne.s32.totalorder %s57, %s73
      %p75 = scmp.eq.s32.totalorder %s37, 0
      %p76 = por %p74, %p75
      %s77 = ssub.s32 %s38, %s50
      %p78 = scmp.eq.s32.totalorder %s77, 0
      %s80 = sadd.s32 %s79, 1
      %s81 = scalar_select %p78, %s79, %s80
      %p84 = pneg %p78
      %p85 = scmp.eq.s32.totalorder %s31, 3
      %p86 = por %p84, %p85
      %p87 = scmp.ne.s32.totalorder %s79, %s82
      %p88 = scmp.eq.s32.totalorder %s31, 0
      %p89 = por %p87, %p88
      %p90 = scmp.ne.s32.totalorder %s79, %s82
      %p91 = scmp.eq.s32.totalorder %s36, 3
      %p92 = por %p90, %p91
      %p93 = scmp.ne.s32.totalorder %s82, %s83
      %p94 = scmp.eq.s32.totalorder %s36, 0
      %p95 = por %p93, %p94
      %p96 = scmp.ne.s32.totalorder %s82, %s83
      %p97 = scmp.eq.s32.totalorder %s37, 3
      %p98 = por %p96, %p97
      %p100 = scmp.ne.s32.totalorder %s83, %s99
      %p101 = scmp.eq.s32.totalorder %s37, 0
      %p102 = por %p100, %p101
      %s103 = sld [smem:[#allocation4 + %s38]]
      %s104 = sld [smem:[#allocation4 + %s50]]
      %s105 = ssub.s32 %s103, %s104
      %s106 = ssub.s32 %s39, %s46
      %s107 = sor.u32 %s105, %s106
      %p108 = scmp.eq.s32.totalorder %s107, 0
      %s110 = sadd.s32 %s109, 1
      %s111 = scalar_select %p108, %s109, %s110
      %p114 = pneg %p108
      %p115 = scmp.eq.s32.totalorder %s31, 3
      %p116 = por %p114, %p115
      %p117 = scmp.ne.s32.totalorder %s109, %s112
      %p118 = scmp.eq.s32.totalorder %s31, 0
      %p119 = por %p117, %p118
      %p120 = scmp.ne.s32.totalorder %s109, %s112
      %p121 = scmp.eq.s32.totalorder %s36, 3
      %p122 = por %p120, %p121
      %p123 = scmp.ne.s32.totalorder %s112, %s113
      %p124 = scmp.eq.s32.totalorder %s36, 0
      %p125 = por %p123, %p124
      %p126 = scmp.ne.s32.totalorder %s112, %s113
      %p127 = scmp.eq.s32.totalorder %s37, 3
      %p128 = por %p126, %p127
      %p130 = scmp.ne.s32.totalorder %s113, %s129
      %p131 = scmp.eq.s32.totalorder %s37, 0
      %p132 = por %p130, %p131
      %s133 = sld [smem:[#allocation4 + %s38]]
      %s134 = sld [smem:[#allocation4 + %s50]]
      %s135 = ssub.s32 %s133, %s134
      %s136 = ssub.s32 %s39, %s46
      %s137 = sor.u32 %s135, %s136
      %p138 = scmp.eq.s32.totalorder %s137, 0
      %s140 = sadd.s32 %s139, 1
      %s141 = scalar_select %p138, %s139, %s140
      %p144 = pneg %p138
      %p145 = scmp.eq.s32.totalorder %s31, 3
      %p146 = por %p144, %p145
      %p147 = scmp.ne.s32.totalorder %s139, %s142
      %p148 = scmp.eq.s32.totalorder %s31, 0
      %p149 = por %p147, %p148
      %p150 = scmp.ne.s32.totalorder %s139, %s142
      %p151 = scmp.eq.s32.totalorder %s36, 3
      %p152 = por %p150, %p151
      %p153 = scmp.ne.s32.totalorder %s142, %s143
      %p154 = scmp.eq.s32.totalorder %s36, 0
      %p155 = por %p153, %p154
      %p156 = scmp.ne.s32.totalorder %s142, %s143
      %p157 = scmp.eq.s32.totalorder %s37, 3
      %p158 = por %p156, %p157
      %p160 = scmp.ne.s32.totalorder %s143, %s159
      %p161 = scmp.eq.s32.totalorder %s37, 0
      %p162 = por %p160, %p161
      %s163 = sld [smem:[#allocation4 + %s38]]
      %s164 = sld [smem:[#allocation4 + %s50]]
      %s165 = ssub.s32 %s163, %s164
      %s166 = ssub.s32 %s39, %s46
      %s167 = sor.u32 %s165, %s166
      %p168 = scmp.eq.s32.totalorder %s167, 0
      %s170 = sadd.s32 %s169, 1
      %s171 = scalar_select %p168, %s169, %s170
      %p174 = pneg %p168
      %p175 = scmp.eq.s32.totalorder %s31, 3
      %p176 = por %p174, %p175
      %p177 = scmp.ne.s32.totalorder %s169, %s172
      %p178 = scmp.eq.s32.totalorder %s31, 0
      %p179 = por %p177, %p178
      %p180 = scmp.ne.s32.totalorder %s169, %s172
      %p181 = scmp.eq.s32.totalorder %s36, 3
      %p182 = por %p180, %p181
      %p183 = scmp.ne.s32.totalorder %s172, %s173
      %p184 = scmp.eq.s32.totalorder %s36, 0
      %p185 = por %p183, %p184
      %p186 = scmp.ne.s32.totalorder %s172, %s173
      %p187 = scmp.eq.s32.totalorder %s37, 3
      %p188 = por %p186, %p187
      %p190 = scmp.ne.s32.totalorder %s173, %s189
      %p191 = scmp.eq.s32.totalorder %s37, 0
      %p192 = por %p190, %p191
      %s193 = sld [smem:[#allocation4 + %s38]]
      %s194 = sld [smem:[#allocation4 + %s50]]
      %s195 = ssub.s32 %s193, %s194
      %p196 = scmp.eq.s32.totalorder %s195, 0
      %s198 = sadd.s32 %s197, 1
      %s199 = scalar_select %p196, %s197, %s198
      %p202 = pneg %p196
      %p203 = scmp.eq.s32.totalorder %s31, 3
      %p204 = por %p202, %p203
      %p205 = scmp.ne.s32.totalorder %s197, %s200
      %p206 = scmp.eq.s32.totalorder %s31, 0
      %p207 = por %p205, %p206
      %p208 = scmp.ne.s32.totalorder %s197, %s200
      %p209 = scmp.eq.s32.totalorder %s36, 3
      %p210 = por %p208, %p209
      %p211 = scmp.ne.s32.totalorder %s200, %s201
      %p212 = scmp.eq.s32.totalorder %s36, 0
      %p213 = por %p211, %p212
      %p214 = scmp.ne.s32.totalorder %s200, %s201
      %p215 = scmp.eq.s32.totalorder %s37, 3
      %p216 = por %p214, %p215
      %p218 = scmp.ne.s32.totalorder %s201, %s217
      %p219 = scmp.eq.s32.totalorder %s37, 0
      %p220 = por %p218, %p219
      %s221 = sld [smem:[#allocation4 + %s38]]
      %s222 = sld [smem:[#allocation4 + %s50]]
      %s223 = ssub.s32 %s221, %s222
      %p224 = scmp.eq.s32.totalorder %s223, 0
      %s226 = sadd.s32 %s225, 1
      %s227 = scalar_select %p224, %s225, %s226
      %p230 = pneg %p224
      %p231 = scmp.eq.s32.totalorder %s31, 3
      %p232 = por %p230, %p231
      %p233 = scmp.ne.s32.totalorder %s225, %s228
      %p234 = scmp.eq.s32.totalorder %s31, 0
      %p235 = por %p233, %p234
      %p236 = scmp.ne.s32.totalorder %s225, %s228
      %p237 = scmp.eq.s32.totalorder %s36, 3
      %p238 = por %p236, %p237
      %p239 = scmp.ne.s32.totalorder %s228, %s229
      %p240 = scmp.eq.s32.totalorder %s36, 0
      %p241 = por %p239, %p240
      %p242 = scmp.ne.s32.totalorder %s228, %s229
      %p243 = scmp.eq.s32.totalorder %s37, 3
      %p244 = por %p242, %p243
      %p246 = scmp.ne.s32.totalorder %s229, %s245
      %p247 = scmp.eq.s32.totalorder %s37, 0
      %p248 = por %p246, %p247
      %s249 = sld [smem:[#allocation4 + %s38]]
      %s250 = sld [smem:[#allocation4 + %s50]]
      %s251 = ssub.s32 %s249, %s250
      %p252 = scmp.eq.s32.totalorder %s251, 0
      %s254 = sadd.s32 %s253, 1
      %s255 = scalar_select %p252, %s253, %s254
      %p258 = pneg %p252
      %p259 = scmp.eq.s32.totalorder %s31, 3
      %p260 = por %p258, %p259
      %p261 = scmp.ne.s32.totalorder %s253, %s256
      %p262 = scmp.eq.s32.totalorder %s31, 0
      %p263 = por %p261, %p262
      %p264 = scmp.ne.s32.totalorder %s253, %s256
      %p265 = scmp.eq.s32.totalorder %s36, 3
      %p266 = por %p264, %p265
      %p267 = scmp.ne.s32.totalorder %s256, %s257
      %p268 = scmp.eq.s32.totalorder %s36, 0
      %p269 = por %p267, %p268
      %p270 = scmp.ne.s32.totalorder %s256, %s257
      %p271 = scmp.eq.s32.totalorder %s37, 3
      %p272 = por %p270, %p271
      %p274 = scmp.ne.s32.totalorder %s257, %s273
      %p275 = scmp.eq.s32.totalorder %s37, 0
      %p276 = por %p274, %p275
      %s277 = ssub.s32 %s38, %s50
      %p278 = scmp.eq.s32.totalorder %s277, 0
      %s280 = sadd.s32 %s279, 1
      %s281 = scalar_select %p278, %s279, %s280
      %p284 = pneg %p278
      %p285 = scmp.eq.s32.totalorder %s31, 3
      %p286 = por %p284, %p285
      %p287 = scmp.ne.s32.totalorder %s279, %s282
      %p288 = scmp.eq.s32.totalorder %s31, 0
      %p289 = por %p287, %p288
      %p290 = scmp.ne.s32.totalorder %s279, %s282
      %p291 = scmp.eq.s32.totalorder %s36, 3
      %p292 = por %p290, %p291
      %p293 = scmp.ne.s32.totalorder %s282, %s283
      %p294 = scmp.eq.s32.totalorder %s36, 0
      %p295 = por %p293, %p294
      %p296 = scmp.ne.s32.totalorder %s282, %s283
      %p297 = scmp.eq.s32.totalorder %s37, 3
      %p298 = por %p296, %p297
      %p300 = scmp.ne.s32.totalorder %s283, %s299
      %p301 = scmp.eq.s32.totalorder %s37, 0
      %p302 = por %p300, %p301
      %p303 = scmp.le.s32.totalorder 1, %s31
      %p304 = scmp.lt.s32.totalorder %s31, 5
      %p305 = pnand %p303, %p304
      %p306 = pneg %p305
      // Predicated region
      $region9: #{tpu_custom_call.1} parent=5 // pred_check
        _
      $region10: #{tpu_custom_call.1} parent=5 // pred_check_branch
        %308 = sbr.rel (%p305) target = $region12
      $region11: #{tpu_custom_call.1} parent=5 // pred_region
        %s309 = ssub.s32 %s31, 1
      $region12: #{tpu_custom_call.1} parent=5 // pred_fallthru
        _
      %p310 = scmp.lt.s32.totalorder %s31, 4
      // Predicated region
      $region13: #{tpu_custom_call.1} parent=5 // pred_check
        %p311 = pneg %p310
      $region14: #{tpu_custom_call.1} parent=5 // pred_check_branch
        %313 = sbr.rel (%p311) target = $region16
      $region15: #{tpu_custom_call.1} parent=5 // pred_region
        // Predicated region
        $region17: #{tpu_custom_call.1} parent=15 // pred_check
          %p314 = pneg %p63
        $region18: #{tpu_custom_call.1} parent=15 // pred_check_branch
          %316 = sbr.rel (%p314) target = $region20
        $region19: #{tpu_custom_call.1} parent=15 // pred_region
          %s317 = smul.u32 32, %s38
          %p318 = scmp.lt.s32.totalorder %s317, 127
          %s319 = scalar_select %p318, %s317, 127
          %s320 = smul.addr %s319, 4
          %s321 = scalar_lea.vmem %s2, %s320
          %s322 = smul.u32 32, %s38
        $region20: #{tpu_custom_call.1} parent=15 // pred_fallthru
          _
        // Predicated region
        $region21: #{tpu_custom_call.1} parent=15 // pred_check
          %p323 = pneg %p89
        $region22: #{tpu_custom_call.1} parent=15 // pred_check_branch
          %325 = sbr.rel (%p323) target = $region24
        $region23: #{tpu_custom_call.1} parent=15 // pred_region
          %s326 = smul.u32 32, %s38
          %p327 = scmp.lt.s32.totalorder %s326, 127
          %s328 = scalar_select %p327, %s326, 127
          %s329 = smul.addr %s328, 8
          %s330 = scalar_lea.vmem %s3, %s329
          %s331 = smul.u32 32, %s38
        $region24: #{tpu_custom_call.1} parent=15 // pred_fallthru
          _
        // Predicated region
        $region25: #{tpu_custom_call.1} parent=15 // pred_check
          %p332 = pneg %p119
        $region26: #{tpu_custom_call.1} parent=15 // pred_check_branch
          %334 = sbr.rel (%p332) target = $region28
        $region27: #{tpu_custom_call.1} parent=15 // pred_region
          %s335 = sld [smem:[#allocation4 + %s38]]
          %s336 = smul.u32 2, %s39
          %p337 = scmp.lt.s32.totalorder %s335, 3
          %s338 = scalar_select %p337, %s335, 3
          %p339 = scmp.lt.s32.totalorder %s336, 1
          %s340 = scalar_select %p339, %s336, 1
          %s341 = smul.addr %s338, 32
          %s342 = sadd.s32 %s340, %s341
          %s343 = smul.addr %s342, 4
          %s344 = scalar_lea.vmem %s4, %s343
          %s345 = sld [smem:[#allocation4 + %s38]]
          %s346 = smul.u32 2, %s39
        $region28: #{tpu_custom_call.1} parent=15 // pred_fallthru
          _
        // Predicated region
        $region29: #{tpu_custom_call.1} parent=15 // pred_check
          %p347 = pneg %p149
        $region30: #{tpu_custom_call.1} parent=15 // pred_check_branch
          %349 = sbr.rel (%p347) target = $region32
        $region31: #{tpu_custom_call.1} parent=15 // pred_region
          %s350 = sand.u32 %s139, 1
          %s351 = scalar_lea.sflag [#allocation7], %s350
          %s352 = sand.u32 %s139, 1
          %s353 = smul.addr %s352, 128
          %s354 = scalar_lea.vmem [#allocation6], %s353
          %s355 = sld [smem:[#allocation4 + %s38]]
          %s356 = smul.u32 2, %s39
          %s358 = ssub.s32 2048, 2048
          %359 = vsyncadd %s351, %s358
          %s360 = smul.addr %s355, 32
          %s361 = sadd.s32 %s356, %s360
          %s362 = smul.addr %s361, 64
          %s363 = scalar_lea.hbm %s5, %s362
          %s364 = sshll.u32 %s354, 4
          %s365 = int_to_ptr.vmem [resolvable:$true] %s364
          %370 = dma.hbm_to_vmem [thread:$0]  %s363, 2048, %s365, %s351, 128, 128, 8
        $region32: #{tpu_custom_call.1} parent=15 // pred_fallthru
          _
        // Predicated region
        $region33: #{tpu_custom_call.1} parent=15 // pred_check
          %p371 = pneg %p179
        $region34: #{tpu_custom_call.1} parent=15 // pred_check_branch
          %373 = sbr.rel (%p371) target = $region36
        $region35: #{tpu_custom_call.1} parent=15 // pred_region
          %s374 = sand.u32 %s169, 1
          %s375 = scalar_lea.sflag [#allocation10], %s374
          %s376 = sand.u32 %s169, 1
          %s377 = smul.addr %s376, 128
          %s378 = scalar_lea.vmem [#allocation9], %s377
          %s379 = sld [smem:[#allocation4 + %s38]]
          %s380 = smul.u32 32, %s39
          %s382 = ssub.s32 2048, 2048
          %383 = vsyncadd %s375, %s382
          %s384 = smul.addr %s379, 32
          %s385 = sadd.s32 %s380, %s384
          %s386 = smul.addr %s385, 64
          %s387 = scalar_lea.hbm %s6, %s386
          %s388 = sshll.u32 %s378, 4
          %s389 = int_to_ptr.vmem [resolvable:$true] %s388
          %394 = dma.hbm_to_vmem [thread:$0]  %s387, 2048, %s389, %s375, 64, 64, 4
        $region36: #{tpu_custom_call.1} parent=15 // pred_fallthru
          _
        // Predicated region
        $region37: #{tpu_custom_call.1} parent=15 // pred_check
          %p395 = pneg %p207
        $region38: #{tpu_custom_call.1} parent=15 // pred_check_branch
          %397 = sbr.rel (%p395) target = $region40
        $region39: #{tpu_custom_call.1} parent=15 // pred_region
          %s398 = sld [smem:[#allocation4 + %s38]]
          %p399 = scmp.lt.s32.totalorder %s398, 3
          %s400 = scalar_select %p399, %s398, 3
          %s401 = smul.addr %s400, 2
          %s402 = scalar_lea.vmem %s7, %s401
          %s403 = sld [smem:[#allocation4 + %s38]]
        $region40: #{tpu_custom_call.1} parent=15 // pred_fallthru
          _
        // Predicated region
        $region41: #{tpu_custom_call.1} parent=15 // pred_check
          %p404 = pneg %p235
        $region42: #{tpu_custom_call.1} parent=15 // pred_check_branch
          %406 = sbr.rel (%p404) target = $region44
        $region43: #{tpu_custom_call.1} parent=15 // pred_region
          %s407 = sld [smem:[#allocation4 + %s38]]
          %p408 = scmp.lt.s32.totalorder %s407, 3
          %s409 = scalar_select %p408, %s407, 3
          %s410 = smul.addr %s409, 2
          %s411 = scalar_lea.vmem %s8, %s410
          %s412 = sld [smem:[#allocation4 + %s38]]
        $region44: #{tpu_custom_call.1} parent=15 // pred_fallthru
          _
        // Predicated region
        $region45: #{tpu_custom_call.1} parent=15 // pred_check
          %p413 = pneg %p263
        $region46: #{tpu_custom_call.1} parent=15 // pred_check_branch
          %415 = sbr.rel (%p413) target = $region48
        $region47: #{tpu_custom_call.1} parent=15 // pred_region
          %s416 = sld [smem:[#allocation4 + %s38]]
          %p417 = scmp.lt.s32.totalorder %s416, 3
          %s418 = scalar_select %p417, %s416, 3
          %s419 = scalar_lea.vmem %s9, %s418
          %s420 = sld [smem:[#allocation4 + %s38]]
        $region48: #{tpu_custom_call.1} parent=15 // pred_fallthru
          _
      $region16: #{tpu_custom_call.1} parent=5 // pred_fallthru
        _
      %p421 = scmp.le.s32.totalorder 1, %s31
      %p422 = scmp.lt.s32.totalorder %s31, 5
      %p423 = pnand %p421, %p422
      %p424 = pneg %p423
      // Predicated region
      $region49: #{tpu_custom_call.1} parent=5 // pred_check
        _
      $region50: #{tpu_custom_call.1} parent=5 // pred_check_branch
        %426 = sbr.rel (%p423) target = $region52
      $region51: #{tpu_custom_call.1} parent=5 // pred_region
        %s427 = ssub.s32 %s31, 1
        %s428 = sand.u32 %s142, 1
        %s429 = scalar_lea.sflag [#allocation7], %s428
        %s430 = sand.u32 %s142, 1
        %s431 = smul.addr %s430, 128
        %s432 = scalar_lea.vmem [#allocation6], %s431
        // Predicated region
        $region53: #{tpu_custom_call.1} parent=51 // pred_check
          %p433 = pneg %p155
        $region54: #{tpu_custom_call.1} parent=51 // pred_check_branch
          %435 = sbr.rel (%p433) target = $region56
        $region55: #{tpu_custom_call.1} parent=51 // pred_region
          %436 = dma.done %s429, 2048
        $region56: #{tpu_custom_call.1} parent=51 // pred_fallthru
          _
        %s437 = sand.u32 %s172, 1
        %s438 = scalar_lea.sflag [#allocation10], %s437
        %s439 = sand.u32 %s172, 1
        %s440 = smul.addr %s439, 128
        %s441 = scalar_lea.vmem [#allocation9], %s440
        // Predicated region
        $region57: #{tpu_custom_call.1} parent=51 // pred_check
          %p442 = pneg %p185
        $region58: #{tpu_custom_call.1} parent=51 // pred_check_branch
          %444 = sbr.rel (%p442) target = $region60
        $region59: #{tpu_custom_call.1} parent=51 // pred_region
          %445 = dma.done %s438, 2048
        $region60: #{tpu_custom_call.1} parent=51 // pred_fallthru
          _
        %s446 = smul.u32 32, %s40
        %p447 = scmp.lt.s32.totalorder %s446, 127
        %s448 = scalar_select %p447, %s446, 127
        %s449 = smul.addr %s448, 4
        %s450 = scalar_lea.vmem %s2, %s449
        %p451 = pneg %p69
        %p452 = pneg %p66
        %s453 = smul.u32 32, %s40
        %p454 = scmp.lt.s32.totalorder %s453, 127
        %s455 = scalar_select %p454, %s453, 127
        %s456 = smul.addr %s455, 8
        %s457 = scalar_lea.vmem %s3, %s456
        %p458 = pneg %p95
        %p459 = pneg %p92
        %s460 = sld [smem:[#allocation4 + %s40]]
        %s461 = smul.u32 2, %s41
        %p462 = scmp.lt.s32.totalorder %s460, 3
        %s463 = scalar_select %p462, %s460, 3
        %p464 = scmp.lt.s32.totalorder %s461, 1
        %s465 = scalar_select %p464, %s461, 1
        %s466 = smul.addr %s463, 32
        %s467 = sadd.s32 %s465, %s466
        %s468 = smul.addr %s467, 4
        %s469 = scalar_lea.vmem %s4, %s468
        %p470 = pneg %p125
        %p471 = pneg %p122
        %s472 = sand.u32 %s142, 1
        %s473 = scalar_lea.sflag [#allocation7], %s472
        %s474 = sand.u32 %s142, 1
        %s475 = smul.addr %s474, 128
        %s476 = scalar_lea.vmem [#allocation6], %s475
        %p477 = pneg %p155
        %p478 = pneg %p152
        %s479 = sand.u32 %s172, 1
        %s480 = scalar_lea.sflag [#allocation10], %s479
        %s481 = sand.u32 %s172, 1
        %s482 = smul.addr %s481, 128
        %s483 = scalar_lea.vmem [#allocation9], %s482
        %p484 = pneg %p185
        %p485 = pneg %p182
        %s486 = sld [smem:[#allocation4 + %s40]]
        %p487 = scmp.lt.s32.totalorder %s486, 3
        %s488 = scalar_select %p487, %s486, 3
        %s489 = smul.addr %s488, 2
        %s490 = scalar_lea.vmem %s7, %s489
        %p491 = pneg %p213
        %p492 = pneg %p210
        %s493 = sld [smem:[#allocation4 + %s40]]
        %p494 = scmp.lt.s32.totalorder %s493, 3
        %s495 = scalar_select %p494, %s493, 3
        %s496 = smul.addr %s495, 2
        %s497 = scalar_lea.vmem %s8, %s496
        %p498 = pneg %p241
        %p499 = pneg %p238
        %s500 = sld [smem:[#allocation4 + %s40]]
        %p501 = scmp.lt.s32.totalorder %s500, 3
        %s502 = scalar_select %p501, %s500, 3
        %s503 = scalar_lea.vmem %s9, %s502
        %p504 = pneg %p269
        %p505 = pneg %p266
        %p506 = pneg %p295
        %p507 = pneg %p292
        %s508 = sand.u32 %s282, 1
        %s509 = scalar_lea.sflag [#allocation8], %s508
        %s510 = sand.u32 %s282, 1
        %s511 = smul.addr %s510, 128
        %s512 = scalar_lea.vmem [#allocation11], %s511
        %s513 = smul.u32 32, %s40
        %p514 = scmp.lt.s32.totalorder %s513, 127
        %s515 = scalar_select %p514, %s513, 127
        %s516 = smul.addr %s515, 4
        %s517 = scalar_lea.vmem %s2, %s516
        %s518 = smul.u32 32, %s40
        %s519 = smul.u32 32, %s40
        %p520 = scmp.lt.s32.totalorder %s519, 127
        %s521 = scalar_select %p520, %s519, 127
        %s522 = smul.addr %s521, 8
        %s523 = scalar_lea.vmem %s3, %s522
        %s524 = smul.u32 32, %s40
        %s525 = sld [smem:[#allocation4 + %s40]]
        %s526 = smul.u32 2, %s41
        %p527 = scmp.lt.s32.totalorder %s525, 3
        %s528 = scalar_select %p527, %s525, 3
        %p529 = scmp.lt.s32.totalorder %s526, 1
        %s530 = scalar_select %p529, %s526, 1
        %s531 = smul.addr %s528, 32
        %s532 = sadd.s32 %s530, %s531
        %s533 = smul.addr %s532, 4
        %s534 = scalar_lea.vmem %s4, %s533
        %s535 = sld [smem:[#allocation4 + %s40]]
        %s536 = smul.u32 2, %s41
        %s537 = sld [smem:[#allocation4 + %s40]]
        %s538 = smul.u32 2, %s41
        %s539 = sld [smem:[#allocation4 + %s40]]
        %s540 = smul.u32 32, %s41
        %s541 = sld [smem:[#allocation4 + %s40]]
        %p542 = scmp.lt.s32.totalorder %s541, 3
        %s543 = scalar_select %p542, %s541, 3
        %s544 = smul.addr %s543, 2
        %s545 = scalar_lea.vmem %s7, %s544
        %s546 = sld [smem:[#allocation4 + %s40]]
        %s547 = sld [smem:[#allocation4 + %s40]]
        %p548 = scmp.lt.s32.totalorder %s547, 3
        %s549 = scalar_select %p548, %s547, 3
        %s550 = smul.addr %s549, 2
        %s551 = scalar_lea.vmem %s8, %s550
        %s552 = sld [smem:[#allocation4 + %s40]]
        %s553 = sld [smem:[#allocation4 + %s40]]
        %p554 = scmp.lt.s32.totalorder %s553, 3
        %s555 = scalar_select %p554, %s553, 3
        %s556 = scalar_lea.vmem %s9, %s555
        %s557 = sld [smem:[#allocation4 + %s40]]
        %s558 = smul.u32 32, %s40
        %p560 = scmp.eq.s32.totalorder %s41, 0
        // Predicated region
        $region61: #{tpu_custom_call.1} parent=51 // pred_check
          %p561 = pneg %p560
        $region62: #{tpu_custom_call.1} parent=51 // pred_check_branch
          %563 = sbr.rel (%p561) target = $region64
        $region63: #{tpu_custom_call.1} parent=51 // pred_region
          %564 = vst [vmem:[#allocation2] sm:$0xff] 0.0
          %565 = vst [vmem:[#allocation2 + $0x8] sm:$0xff] 0.0
          %566 = vst [vmem:[#allocation2 + $0x10] sm:$0xff] 0.0
          %567 = vst [vmem:[#allocation2 + $0x18] sm:$0xff] 0.0
          %568 = vst [vmem:[#allocation2 + $0x20] sm:$0xff] 0.0
          %569 = vst [vmem:[#allocation2 + $0x28] sm:$0xff] 0.0
          %570 = vst [vmem:[#allocation2 + $0x30] sm:$0xff] 0.0
          %571 = vst [vmem:[#allocation2 + $0x38] sm:$0xff] 0.0
          %572 = vst [vmem:[#allocation2 + $0x40] sm:$0xff] 0.0
          %573 = vst [vmem:[#allocation2 + $0x48] sm:$0xff] 0.0
          %574 = vst [vmem:[#allocation2 + $0x50] sm:$0xff] 0.0
          %575 = vst [vmem:[#allocation2 + $0x58] sm:$0xff] 0.0
          %576 = vst [vmem:[#allocation2 + $0x60] sm:$0xff] 0.0
          %577 = vst [vmem:[#allocation2 + $0x68] sm:$0xff] 0.0
          %578 = vst [vmem:[#allocation2 + $0x70] sm:$0xff] 0.0
          %579 = vst [vmem:[#allocation2 + $0x78] sm:$0xff] 0.0
          %580 = vst [vmem:[#allocation2 + $0x80] sm:$0xff] 0.0
          %581 = vst [vmem:[#allocation2 + $0x88] sm:$0xff] 0.0
          %582 = vst [vmem:[#allocation2 + $0x90] sm:$0xff] 0.0
          %583 = vst [vmem:[#allocation2 + $0x98] sm:$0xff] 0.0
          %584 = vst [vmem:[#allocation2 + $0xa0] sm:$0xff] 0.0
          %585 = vst [vmem:[#allocation2 + $0xa8] sm:$0xff] 0.0
          %586 = vst [vmem:[#allocation2 + $0xb0] sm:$0xff] 0.0
          %587 = vst [vmem:[#allocation2 + $0xb8] sm:$0xff] 0.0
          %588 = vst [vmem:[#allocation2 + $0xc0] sm:$0xff] 0.0
          %589 = vst [vmem:[#allocation2 + $0xc8] sm:$0xff] 0.0
          %590 = vst [vmem:[#allocation2 + $0xd0] sm:$0xff] 0.0
          %591 = vst [vmem:[#allocation2 + $0xd8] sm:$0xff] 0.0
          %592 = vst [vmem:[#allocation2 + $0xe0] sm:$0xff] 0.0
          %593 = vst [vmem:[#allocation2 + $0xe8] sm:$0xff] 0.0
          %594 = vst [vmem:[#allocation2 + $0xf0] sm:$0xff] 0.0
          %595 = vst [vmem:[#allocation2 + $0xf8] sm:$0xff] 0.0
        $region64: #{tpu_custom_call.1} parent=51 // pred_fallthru
          _
        %s596 = sld [smem:[#allocation5 + %s40]]
        %p597 = scmp.ne.s32.totalorder %s596, 0
        // Predicated region
        $region65: #{tpu_custom_call.1} parent=51 // pred_check
          %p598 = pneg %p597
        $region66: #{tpu_custom_call.1} parent=51 // pred_check_branch
          %600 = sbr.rel (%p598) target = $region68
        $region67: #{tpu_custom_call.1} parent=51 // pred_region
          %s601 = smul.u32 %s41, 256
          %v602 = vld [vmem:[%s517] sm:$0xf]
          %v603 = vld [vmem:[%s517 + $0x4] sm:$0xf]
          %v604 = vld [vmem:[%s517 + $0x8] sm:$0xf]
          %v605 = vld [vmem:[%s517 + $0xc] sm:$0xf]
          %v606 = vld [vmem:[%s517 + $0x10] sm:$0xf]
          %v607 = vld [vmem:[%s517 + $0x14] sm:$0xf]
          %v608 = vld [vmem:[%s517 + $0x18] sm:$0xf]
          %v609 = vld [vmem:[%s517 + $0x1c] sm:$0xf]
          %v610 = vld [vmem:[%s517 + $0x20] sm:$0xf]
          %v611 = vld [vmem:[%s517 + $0x24] sm:$0xf]
          %v612 = vld [vmem:[%s517 + $0x28] sm:$0xf]
          %v613 = vld [vmem:[%s517 + $0x2c] sm:$0xf]
          %v614 = vld [vmem:[%s517 + $0x30] sm:$0xf]
          %v615 = vld [vmem:[%s517 + $0x34] sm:$0xf]
          %v616 = vld [vmem:[%s517 + $0x38] sm:$0xf]
          %v617 = vld [vmem:[%s517 + $0x3c] sm:$0xf]
          %v618 = vld [vmem:[%s517 + $0x40] sm:$0xf]
          %v619 = vld [vmem:[%s517 + $0x44] sm:$0xf]
          %v620 = vld [vmem:[%s517 + $0x48] sm:$0xf]
          %v621 = vld [vmem:[%s517 + $0x4c] sm:$0xf]
          %v622 = vld [vmem:[%s517 + $0x50] sm:$0xf]
          %v623 = vld [vmem:[%s517 + $0x54] sm:$0xf]
          %v624 = vld [vmem:[%s517 + $0x58] sm:$0xf]
          %v625 = vld [vmem:[%s517 + $0x5c] sm:$0xf]
          %v626 = vld [vmem:[%s517 + $0x60] sm:$0xf]
          %v627 = vld [vmem:[%s517 + $0x64] sm:$0xf]
          %v628 = vld [vmem:[%s517 + $0x68] sm:$0xf]
          %v629 = vld [vmem:[%s517 + $0x6c] sm:$0xf]
          %v630 = vld [vmem:[%s517 + $0x70] sm:$0xf]
          %v631 = vld [vmem:[%s517 + $0x74] sm:$0xf]
          %v632 = vld [vmem:[%s517 + $0x78] sm:$0xf]
          %v633 = vld [vmem:[%s517 + $0x7c] sm:$0xf]
          %s634 = sshra.s32 %s601, 7
          %s635 = sand.u32 %s601, 127
          %s636 = scalar_lea.vmem %s545, %s634
          %v637 = vld [vmem:[%s636] sm:$0x3]
          %s638 = scalar_lea.vmem %s551, %s634
          %v639 = vld [vmem:[%s638] sm:$0x3]
          %v640 = vld [vmem:[%s534] sm:$0xff]
          %v641 = vld [vmem:[%s534 + $0x8] sm:$0xff]
          %v642 = vld [vmem:[%s534 + $0x10] sm:$0xff]
          %v643 = vld [vmem:[%s534 + $0x18] sm:$0xff]
          %v644 = vld [vmem:[%s534 + $0x20] sm:$0xff]
          %v645 = vld [vmem:[%s534 + $0x28] sm:$0xff]
          %v646 = vld [vmem:[%s534 + $0x30] sm:$0xff]
          %v647 = vld [vmem:[%s534 + $0x38] sm:$0xff]
          %v648 = vld [vmem:[%s534 + $0x40] sm:$0xff]
          %v649 = vld [vmem:[%s534 + $0x48] sm:$0xff]
          %v650 = vld [vmem:[%s534 + $0x50] sm:$0xff]
          %v651 = vld [vmem:[%s534 + $0x58] sm:$0xff]
          %v652 = vld [vmem:[%s534 + $0x60] sm:$0xff]
          %v653 = vld [vmem:[%s534 + $0x68] sm:$0xff]
          %v654 = vld [vmem:[%s534 + $0x70] sm:$0xff]
          %v655 = vld [vmem:[%s534 + $0x78] sm:$0xff]
          %v657 = vlaneseq
          %v658 = vshrl.u32 %v657, 7
          %v659 = vsub.s32 0, %v658
          %v660 = vrot.slane %v637, %v659
          %v661 = vlaneseq
          %v662 = vshrl.u32 %v661, 7
          %v663 = vsub.s32 1, %v662
          %v664 = vrot.slane %v637, %v663
          %v699 = vunpack.c.l.b16 %v602
          %v700 = vunpack.c.l.b16 %v603
          %v701 = vunpack.c.l.b16 %v604
          %v702 = vunpack.c.l.b16 %v605
          %v703 = vunpack.c.l.b16 %v606
          %v704 = vunpack.c.l.b16 %v607
          %v705 = vunpack.c.l.b16 %v608
          %v706 = vunpack.c.l.b16 %v609
          %v707 = vunpack.c.l.b16 %v610
          %v708 = vunpack.c.l.b16 %v611
          %v709 = vunpack.c.l.b16 %v612
          %v710 = vunpack.c.l.b16 %v613
          %v711 = vunpack.c.l.b16 %v614
          %v712 = vunpack.c.l.b16 %v615
          %v713 = vunpack.c.l.b16 %v616
          %v714 = vunpack.c.l.b16 %v617
          %v715 = vunpack.c.l.b16 %v618
          %v716 = vunpack.c.l.b16 %v619
          %v717 = vunpack.c.l.b16 %v620
          %v718 = vunpack.c.l.b16 %v621
          %v719 = vunpack.c.l.b16 %v622
          %v720 = vunpack.c.l.b16 %v623
          %v721 = vunpack.c.l.b16 %v624
          %v722 = vunpack.c.l.b16 %v625
          %v723 = vunpack.c.l.b16 %v626
          %v724 = vunpack.c.l.b16 %v627
          %v725 = vunpack.c.l.b16 %v628
          %v726 = vunpack.c.l.b16 %v629
          %v727 = vunpack.c.l.b16 %v630
          %v728 = vunpack.c.l.b16 %v631
          %v729 = vunpack.c.l.b16 %v632
          %v730 = vunpack.c.l.b16 %v633
          %v731 = vpack.c.b16 %v700, %v699
          %v732 = vpack.c.b16 %v702, %v701
          %v733 = vpack.c.b16 %v704, %v703
          %v734 = vpack.c.b16 %v706, %v705
          %v735 = vpack.c.b16 %v708, %v707
          %v736 = vpack.c.b16 %v710, %v709
          %v737 = vpack.c.b16 %v712, %v711
          %v738 = vpack.c.b16 %v714, %v713
          %v739 = vpack.c.b16 %v716, %v715
          %v740 = vpack.c.b16 %v718, %v717
          %v741 = vpack.c.b16 %v720, %v719
          %v742 = vpack.c.b16 %v722, %v721
          %v743 = vpack.c.b16 %v724, %v723
          %v744 = vpack.c.b16 %v726, %v725
          %v745 = vpack.c.b16 %v728, %v727
          %v746 = vpack.c.b16 %v730, %v729
          %v779 = vunpack.c.l.b16 %v640
          %v780 = vunpack.c.h.b16 %v640
          %v781 = vunpack.c.l.b16 %v641
          %v782 = vunpack.c.h.b16 %v641
          %v783 = vunpack.c.l.b16 %v642
          %v784 = vunpack.c.h.b16 %v642
          %v785 = vunpack.c.l.b16 %v643
          %v786 = vunpack.c.h.b16 %v643
          %v787 = vunpack.c.l.b16 %v644
          %v788 = vunpack.c.h.b16 %v644
          %v789 = vunpack.c.l.b16 %v645
          %v790 = vunpack.c.h.b16 %v645
          %v791 = vunpack.c.l.b16 %v646
          %v792 = vunpack.c.h.b16 %v646
          %v793 = vunpack.c.l.b16 %v647
          %v794 = vunpack.c.h.b16 %v647
          %v795 = vunpack.c.l.b16 %v648
          %v796 = vunpack.c.h.b16 %v648
          %v797 = vunpack.c.l.b16 %v649
          %v798 = vunpack.c.h.b16 %v649
          %v799 = vunpack.c.l.b16 %v650
          %v800 = vunpack.c.h.b16 %v650
          %v801 = vunpack.c.l.b16 %v651
          %v802 = vunpack.c.h.b16 %v651
          %v803 = vunpack.c.l.b16 %v652
          %v804 = vunpack.c.h.b16 %v652
          %v805 = vunpack.c.l.b16 %v653
          %v806 = vunpack.c.h.b16 %v653
          %v807 = vunpack.c.l.b16 %v654
          %v808 = vunpack.c.h.b16 %v654
          %v809 = vunpack.c.l.b16 %v655
          %v810 = vunpack.c.h.b16 %v655
          %v811 = vpack.c.b16 %v781, %v779
          %v812 = vpack.c.b16 %v782, %v780
          %v813 = vpack.c.b16 %v785, %v783
          %v814 = vpack.c.b16 %v786, %v784
          %v815 = vpack.c.b16 %v789, %v787
          %v816 = vpack.c.b16 %v790, %v788
          %v817 = vpack.c.b16 %v793, %v791
          %v818 = vpack.c.b16 %v794, %v792
          %v819 = vpack.c.b16 %v797, %v795
          %v820 = vpack.c.b16 %v798, %v796
          %v821 = vpack.c.b16 %v801, %v799
          %v822 = vpack.c.b16 %v802, %v800
          %v823 = vpack.c.b16 %v805, %v803
          %v824 = vpack.c.b16 %v806, %v804
          %v825 = vpack.c.b16 %v809, %v807
          %v826 = vpack.c.b16 %v810, %v808
          %843 = vmatprep.subr.bf16.mxu0 %v812
          %844 = vmatpush1.bf16.msra.mxu0 %v811
          %845 = vmatprep.subr.bf16.mxu0 %v814
          %846 = vmatpush1.bf16.msra.mxu0 %v813
          %847 = vmatprep.subr.bf16.mxu0 %v816
          %848 = vmatpush1.bf16.msra.mxu0 %v815
          %849 = vmatprep.subr.bf16.mxu0 %v818
          %850 = vmatpush1.bf16.msra.mxu0 %v817
          %851 = vmatprep.subr.bf16.mxu0 %v820
          %852 = vmatpush1.bf16.msra.mxu0 %v819
          %853 = vmatprep.subr.bf16.mxu0 %v822
          %854 = vmatpush1.bf16.msra.mxu0 %v821
          %855 = vmatprep.subr.bf16.mxu0 %v824
          %856 = vmatpush1.bf16.msra.mxu0 %v823
          %857 = vmatprep.subr.bf16.mxu0 %v826
          %858 = vmatpush1.bf16.msra.mxu0 %v825
          %859 = vmatprep.subr.bf16.mxu0 0
          %860 = vmatpush1.bf16.msra.mxu0 0
          %861 = vmatprep.subr.bf16.mxu0 0
          %862 = vmatpush1.bf16.msra.mxu0 0
          %863 = vmatprep.subr.bf16.mxu0 0
          %864 = vmatpush1.bf16.msra.mxu0 0
          %865 = vmatprep.subr.bf16.mxu0 0
          %866 = vmatpush1.bf16.msra.mxu0 0
          %867 = vmatprep.subr.bf16.mxu0 0
          %868 = vmatpush1.bf16.msra.mxu0 0
          %869 = vmatprep.subr.bf16.mxu0 0
          %870 = vmatpush1.bf16.msra.mxu0 0
          %871 = vmatprep.subr.bf16.mxu0 0
          %872 = vmatpush1.bf16.msra.mxu0 0
          %873 = vmatprep.subr.bf16.mxu0 0
          %874 = vmatpush1.bf16.msra.mxu0 0
          %875 = vmatprep.mubr.bf16.mxu0 0
          %876 = vmatmul.mubr.bf16.gmra.mrb[0].mxu0 %v731
          %v877 = vpop.f32.mrb[0].mxu0
          %v878 = vadd.f32 %v660, %v877
          %v879 = vpop.f32.mrb[0].mxu0
          %v880 = vadd.f32 %v664, %v879
          %v881 = vpop.f32.mrb[0].mxu0
          %v882 = vadd.f32 %v660, %v881
          %v883 = vpop.f32.mrb[0].mxu0
          %v884 = vadd.f32 %v664, %v883
          %885 = vmatprep.mubr.bf16.mxu0 0
          %886 = vmatmul.mubr.bf16.gmra.mrb[0].mxu0 %v732
          %v887 = vpop.f32.mrb[0].mxu0
          %v888 = vadd.f32 %v660, %v887
          %v889 = vpop.f32.mrb[0].mxu0
          %v890 = vadd.f32 %v664, %v889
          %v891 = vpop.f32.mrb[0].mxu0
          %v892 = vadd.f32 %v660, %v891
          %v893 = vpop.f32.mrb[0].mxu0
          %v894 = vadd.f32 %v664, %v893
          %895 = vmatprep.mubr.bf16.mxu0 0
          %896 = vmatmul.mubr.bf16.gmra.mrb[0].mxu0 %v733
          %v897 = vpop.f32.mrb[0].mxu0
          %v898 = vadd.f32 %v660, %v897
          %v899 = vpop.f32.mrb[0].mxu0
          %v900 = vadd.f32 %v664, %v899
          %v901 = vpop.f32.mrb[0].mxu0
          %v902 = vadd.f32 %v660, %v901
          %v903 = vpop.f32.mrb[0].mxu0
          %v904 = vadd.f32 %v664, %v903
          %905 = vmatprep.mubr.bf16.mxu0 0
          %906 = vmatmul.mubr.bf16.gmra.mrb[0].mxu0 %v734
          %v907 = vpop.f32.mrb[0].mxu0
          %v908 = vadd.f32 %v660, %v907
          %v909 = vpop.f32.mrb[0].mxu0
          %v910 = vadd.f32 %v664, %v909
          %v911 = vpop.f32.mrb[0].mxu0
          %v912 = vadd.f32 %v660, %v911
          %v913 = vpop.f32.mrb[0].mxu0
          %v914 = vadd.f32 %v664, %v913
          %915 = vmatprep.mubr.bf16.mxu0 0
          %916 = vmatmul.mubr.bf16.gmra.mrb[0].mxu0 %v735
          %v917 = vpop.f32.mrb[0].mxu0
          %v918 = vadd.f32 %v660, %v917
          %v919 = vpop.f32.mrb[0].mxu0
          %v920 = vadd.f32 %v664, %v919
          %v921 = vpop.f32.mrb[0].mxu0
          %v922 = vadd.f32 %v660, %v921
          %v923 = vpop.f32.mrb[0].mxu0
          %v924 = vadd.f32 %v664, %v923
          %925 = vmatprep.mubr.bf16.mxu0 0
          %926 = vmatmul.mubr.bf16.gmra.mrb[0].mxu0 %v736
          %v927 = vpop.f32.mrb[0].mxu0
          %v928 = vadd.f32 %v660, %v927
          %v929 = vpop.f32.mrb[0].mxu0
          %v930 = vadd.f32 %v664, %v929
          %v931 = vpop.f32.mrb[0].mxu0
          %v932 = vadd.f32 %v660, %v931
          %v933 = vpop.f32.mrb[0].mxu0
          %v934 = vadd.f32 %v664, %v933
          %935 = vmatprep.mubr.bf16.mxu0 0
          %936 = vmatmul.mubr.bf16.gmra.mrb[0].mxu0 %v737
          %v937 = vpop.f32.mrb[0].mxu0
          %v938 = vadd.f32 %v660, %v937
          %v939 = vpop.f32.mrb[0].mxu0
          %v940 = vadd.f32 %v664, %v939
          %v941 = vpop.f32.mrb[0].mxu0
          %v942 = vadd.f32 %v660, %v941
          %v943 = vpop.f32.mrb[0].mxu0
          %v944 = vadd.f32 %v664, %v943
          %945 = vmatprep.mubr.bf16.mxu0 0
          %946 = vmatmul.mubr.bf16.gmra.mrb[0].mxu0 %v738
          %v947 = vpop.f32.mrb[0].mxu0
          %v948 = vadd.f32 %v660, %v947
          %v949 = vpop.f32.mrb[0].mxu0
          %v950 = vadd.f32 %v664, %v949
          %v951 = vpop.f32.mrb[0].mxu0
          %v952 = vadd.f32 %v660, %v951
          %v953 = vpop.f32.mrb[0].mxu0
          %v954 = vadd.f32 %v664, %v953
          %955 = vmatprep.mubr.bf16.mxu0 0
          %956 = vmatmul.mubr.bf16.gmra.mrb[0].mxu0 %v739
          %v957 = vpop.f32.mrb[0].mxu0
          %v958 = vadd.f32 %v660, %v957
          %v959 = vpop.f32.mrb[0].mxu0
          %v960 = vadd.f32 %v664, %v959
          %v961 = vpop.f32.mrb[0].mxu0
          %v962 = vadd.f32 %v660, %v961
          %v963 = vpop.f32.mrb[0].mxu0
          %v964 = vadd.f32 %v664, %v963
          %965 = vmatprep.mubr.bf16.mxu0 0
          %966 = vmatmul.mubr.bf16.gmra.mrb[0].mxu0 %v740
          %v967 = vpop.f32.mrb[0].mxu0
          %v968 = vadd.f32 %v660, %v967
          %v969 = vpop.f32.mrb[0].mxu0
          %v970 = vadd.f32 %v664, %v969
          %v971 = vpop.f32.mrb[0].mxu0
          %v972 = vadd.f32 %v660, %v971
          %v973 = vpop.f32.mrb[0].mxu0
          %v974 = vadd.f32 %v664, %v973
          %975 = vmatprep.mubr.bf16.mxu0 0
          %976 = vmatmul.mubr.bf16.gmra.mrb[0].mxu0 %v741
          %v977 = vpop.f32.mrb[0].mxu0
          %v978 = vadd.f32 %v660, %v977
          %v979 = vpop.f32.mrb[0].mxu0
          %v980 = vadd.f32 %v664, %v979
          %v981 = vpop.f32.mrb[0].mxu0
          %v982 = vadd.f32 %v660, %v981
          %v983 = vpop.f32.mrb[0].mxu0
          %v984 = vadd.f32 %v664, %v983
          %985 = vmatprep.mubr.bf16.mxu0 0
          %986 = vmatmul.mubr.bf16.gmra.mrb[0].mxu0 %v742
          %v987 = vpop.f32.mrb[0].mxu0
          %v988 = vadd.f32 %v660, %v987
          %v989 = vpop.f32.mrb[0].mxu0
          %v990 = vadd.f32 %v664, %v989
          %v991 = vpop.f32.mrb[0].mxu0
          %v992 = vadd.f32 %v660, %v991
          %v993 = vpop.f32.mrb[0].mxu0
          %v994 = vadd.f32 %v664, %v993
          %995 = vmatprep.mubr.bf16.mxu0 0
          %996 = vmatmul.mubr.bf16.gmra.mrb[0].mxu0 %v743
          %v997 = vpop.f32.mrb[0].mxu0
          %v998 = vadd.f32 %v660, %v997
          %v999 = vpop.f32.mrb[0].mxu0
          %v1000 = vadd.f32 %v664, %v999
          %v1001 = vpop.f32.mrb[0].mxu0
          %v1002 = vadd.f32 %v660, %v1001
          %v1003 = vpop.f32.mrb[0].mxu0
          %v1004 = vadd.f32 %v664, %v1003
          %1005 = vmatprep.mubr.bf16.mxu0 0
          %1006 = vmatmul.mubr.bf16.gmra.mrb[0].mxu0 %v744
          %v1007 = vpop.f32.mrb[0].mxu0
          %v1008 = vadd.f32 %v660, %v1007
          %v1009 = vpop.f32.mrb[0].mxu0
          %v1010 = vadd.f32 %v664, %v1009
          %v1011 = vpop.f32.mrb[0].mxu0
          %v1012 = vadd.f32 %v660, %v1011
          %v1013 = vpop.f32.mrb[0].mxu0
          %v1014 = vadd.f32 %v664, %v1013
          %1015 = vmatprep.mubr.bf16.mxu0 0
          %1016 = vmatmul.mubr.bf16.gmra.mrb[0].mxu0 %v745
          %v1017 = vpop.f32.mrb[0].mxu0
          %v1018 = vadd.f32 %v660, %v1017
          %v1019 = vpop.f32.mrb[0].mxu0
          %v1020 = vadd.f32 %v664, %v1019
          %v1021 = vpop.f32.mrb[0].mxu0
          %v1022 = vadd.f32 %v660, %v1021
          %v1023 = vpop.f32.mrb[0].mxu0
          %v1024 = vadd.f32 %v664, %v1023
          %1025 = vmatprep.mubr.bf16.mxu0 0
          %1026 = vmatmul.mubr.bf16.gmra.mrb[0].mxu0 %v746
          %v1027 = vpop.f32.mrb[0].mxu0
          %v1028 = vadd.f32 %v660, %v1027
          %v1029 = vpop.f32.mrb[0].mxu0
          %v1030 = vadd.f32 %v664, %v1029
          %v1031 = vpop.f32.mrb[0].mxu0
          %v1032 = vadd.f32 %v660, %v1031
          %v1033 = vpop.f32.mrb[0].mxu0
          %v1034 = vadd.f32 %v664, %v1033
          %1035 = vdwg.mxu0
          %v1036 = vxor.u32 %v878, 2147483648
          %v1037 = vxor.u32 %v880, 2147483648
          %v1038 = vxor.u32 %v882, 2147483648
          %v1039 = vxor.u32 %v884, 2147483648
          %v1040 = vxor.u32 %v888, 2147483648
          %v1041 = vxor.u32 %v890, 2147483648
          %v1042 = vxor.u32 %v892, 2147483648
          %v1043 = vxor.u32 %v894, 2147483648
          %v1044 = vxor.u32 %v898, 2147483648
          %v1045 = vxor.u32 %v900, 2147483648
          %v1046 = vxor.u32 %v902, 2147483648
          %v1047 = vxor.u32 %v904, 2147483648
          %v1048 = vxor.u32 %v908, 2147483648
          %v1049 = vxor.u32 %v910, 2147483648
          %v1050 = vxor.u32 %v912, 2147483648
          %v1051 = vxor.u32 %v914, 2147483648
          %v1052 = vxor.u32 %v918, 2147483648
          %v1053 = vxor.u32 %v920, 2147483648
          %v1054 = vxor.u32 %v922, 2147483648
          %v1055 = vxor.u32 %v924, 2147483648
          %v1056 = vxor.u32 %v928, 2147483648
          %v1057 = vxor.u32 %v930, 2147483648
          %v1058 = vxor.u32 %v932, 2147483648
          %v1059 = vxor.u32 %v934, 2147483648
          %v1060 = vxor.u32 %v938, 2147483648
          %v1061 = vxor.u32 %v940, 2147483648
          %v1062 = vxor.u32 %v942, 2147483648
          %v1063 = vxor.u32 %v944, 2147483648
          %v1064 = vxor.u32 %v948, 2147483648
          %v1065 = vxor.u32 %v950, 2147483648
          %v1066 = vxor.u32 %v952, 2147483648
          %v1067 = vxor.u32 %v954, 2147483648
          %v1068 = vxor.u32 %v958, 2147483648
          %v1069 = vxor.u32 %v960, 2147483648
          %v1070 = vxor.u32 %v962, 2147483648
          %v1071 = vxor.u32 %v964, 2147483648
          %v1072 = vxor.u32 %v968, 2147483648
          %v1073 = vxor.u32 %v970, 2147483648
          %v1074 = vxor.u32 %v972, 2147483648
          %v1075 = vxor.u32 %v974, 2147483648
          %v1076 = vxor.u32 %v978, 2147483648
          %v1077 = vxor.u32 %v980, 2147483648
          %v1078 = vxor.u32 %v982, 2147483648
          %v1079 = vxor.u32 %v984, 2147483648
          %v1080 = vxor.u32 %v988, 2147483648
          %v1081 = vxor.u32 %v990, 2147483648
          %v1082 = vxor.u32 %v992, 2147483648
          %v1083 = vxor.u32 %v994, 2147483648
          %v1084 = vxor.u32 %v998, 2147483648
          %v1085 = vxor.u32 %v1000, 2147483648
          %v1086 = vxor.u32 %v1002, 2147483648
          %v1087 = vxor.u32 %v1004, 2147483648
          %v1088 = vxor.u32 %v1008, 2147483648
          %v1089 = vxor.u32 %v1010, 2147483648
          %v1090 = vxor.u32 %v1012, 2147483648
          %v1091 = vxor.u32 %v1014, 2147483648
          %v1092 = vxor.u32 %v1018, 2147483648
          %v1093 = vxor.u32 %v1020, 2147483648
          %v1094 = vxor.u32 %v1022, 2147483648
          %v1095 = vxor.u32 %v1024, 2147483648
          %v1096 = vxor.u32 %v1028, 2147483648
          %v1097 = vxor.u32 %v1030, 2147483648
          %v1098 = vxor.u32 %v1032, 2147483648
          %v1099 = vxor.u32 %v1034, 2147483648
          %v1100 = vmul.f32 %v1036, 1.442695
          %v1101 = vpow.pop %v1100
          %v1102 = vmul.f32 %v1037, 1.442695
          %v1103 = vpow.pop %v1102
          %v1104 = vmul.f32 %v1038, 1.442695
          %v1105 = vpow.pop %v1104
          %v1106 = vmul.f32 %v1039, 1.442695
          %v1107 = vpow.pop %v1106
          %v1108 = vmul.f32 %v1040, 1.442695
          %v1109 = vpow.pop %v1108
          %v1110 = vmul.f32 %v1041, 1.442695
          %v1111 = vpow.pop %v1110
          %v1112 = vmul.f32 %v1042, 1.442695
          %v1113 = vpow.pop %v1112
          %v1114 = vmul.f32 %v1043, 1.442695
          %v1115 = vpow.pop %v1114
          %v1116 = vmul.f32 %v1044, 1.442695
          %v1117 = vpow.pop %v1116
          %v1118 = vmul.f32 %v1045, 1.442695
          %v1119 = vpow.pop %v1118
          %v1120 = vmul.f32 %v1046, 1.442695
          %v1121 = vpow.pop %v1120
          %v1122 = vmul.f32 %v1047, 1.442695
          %v1123 = vpow.pop %v1122
          %v1124 = vmul.f32 %v1048, 1.442695
          %v1125 = vpow.pop %v1124
          %v1126 = vmul.f32 %v1049, 1.442695
          %v1127 = vpow.pop %v1126
          %v1128 = vmul.f32 %v1050, 1.442695
          %v1129 = vpow.pop %v1128
          %v1130 = vmul.f32 %v1051, 1.442695
          %v1131 = vpow.pop %v1130
          %v1132 = vmul.f32 %v1052, 1.442695
          %v1133 = vpow.pop %v1132
          %v1134 = vmul.f32 %v1053, 1.442695
          %v1135 = vpow.pop %v1134
          %v1136 = vmul.f32 %v1054, 1.442695
          %v1137 = vpow.pop %v1136
          %v1138 = vmul.f32 %v1055, 1.442695
          %v1139 = vpow.pop %v1138
          %v1140 = vmul.f32 %v1056, 1.442695
          %v1141 = vpow.pop %v1140
          %v1142 = vmul.f32 %v1057, 1.442695
          %v1143 = vpow.pop %v1142
          %v1144 = vmul.f32 %v1058, 1.442695
          %v1145 = vpow.pop %v1144
          %v1146 = vmul.f32 %v1059, 1.442695
          %v1147 = vpow.pop %v1146
          %v1148 = vmul.f32 %v1060, 1.442695
          %v1149 = vpow.pop %v1148
          %v1150 = vmul.f32 %v1061, 1.442695
          %v1151 = vpow.pop %v1150
          %v1152 = vmul.f32 %v1062, 1.442695
          %v1153 = vpow.pop %v1152
          %v1154 = vmul.f32 %v1063, 1.442695
          %v1155 = vpow.pop %v1154
          %v1156 = vmul.f32 %v1064, 1.442695
          %v1157 = vpow.pop %v1156
          %v1158 = vmul.f32 %v1065, 1.442695
          %v1159 = vpow.pop %v1158
          %v1160 = vmul.f32 %v1066, 1.442695
          %v1161 = vpow.pop %v1160
          %v1162 = vmul.f32 %v1067, 1.442695
          %v1163 = vpow.pop %v1162
          %v1164 = vmul.f32 %v1068, 1.442695
          %v1165 = vpow.pop %v1164
          %v1166 = vmul.f32 %v1069, 1.442695
          %v1167 = vpow.pop %v1166
          %v1168 = vmul.f32 %v1070, 1.442695
          %v1169 = vpow.pop %v1168
          %v1170 = vmul.f32 %v1071, 1.442695
          %v1171 = vpow.pop %v1170
          %v1172 = vmul.f32 %v1072, 1.442695
          %v1173 = vpow.pop %v1172
          %v1174 = vmul.f32 %v1073, 1.442695
          %v1175 = vpow.pop %v1174
          %v1176 = vmul.f32 %v1074, 1.442695
          %v1177 = vpow.pop %v1176
          %v1178 = vmul.f32 %v1075, 1.442695
          %v1179 = vpow.pop %v1178
          %v1180 = vmul.f32 %v1076, 1.442695
          %v1181 = vpow.pop %v1180
          %v1182 = vmul.f32 %v1077, 1.442695
          %v1183 = vpow.pop %v1182
          %v1184 = vmul.f32 %v1078, 1.442695
          %v1185 = vpow.pop %v1184
          %v1186 = vmul.f32 %v1079, 1.442695
          %v1187 = vpow.pop %v1186
          %v1188 = vmul.f32 %v1080, 1.442695
          %v1189 = vpow.pop %v1188
          %v1190 = vmul.f32 %v1081, 1.442695
          %v1191 = vpow.pop %v1190
          %v1192 = vmul.f32 %v1082, 1.442695
          %v1193 = vpow.pop %v1192
          %v1194 = vmul.f32 %v1083, 1.442695
          %v1195 = vpow.pop %v1194
          %v1196 = vmul.f32 %v1084, 1.442695
          %v1197 = vpow.pop %v1196
          %v1198 = vmul.f32 %v1085, 1.442695
          %v1199 = vpow.pop %v1198
          %v1200 = vmul.f32 %v1086, 1.442695
          %v1201 = vpow.pop %v1200
          %v1202 = vmul.f32 %v1087, 1.442695
          %v1203 = vpow.pop %v1202
          %v1204 = vmul.f32 %v1088, 1.442695
          %v1205 = vpow.pop %v1204
          %v1206 = vmul.f32 %v1089, 1.442695
          %v1207 = vpow.pop %v1206
          %v1208 = vmul.f32 %v1090, 1.442695
          %v1209 = vpow.pop %v1208
          %v1210 = vmul.f32 %v1091, 1.442695
          %v1211 = vpow.pop %v1210
          %v1212 = vmul.f32 %v1092, 1.442695
          %v1213 = vpow.pop %v1212
          %v1214 = vmul.f32 %v1093, 1.442695
          %v1215 = vpow.pop %v1214
          %v1216 = vmul.f32 %v1094, 1.442695
          %v1217 = vpow.pop %v1216
          %v1218 = vmul.f32 %v1095, 1.442695
          %v1219 = vpow.pop %v1218
          %v1220 = vmul.f32 %v1096, 1.442695
          %v1221 = vpow.pop %v1220
          %v1222 = vmul.f32 %v1097, 1.442695
          %v1223 = vpow.pop %v1222
          %v1224 = vmul.f32 %v1098, 1.442695
          %v1225 = vpow.pop %v1224
          %v1226 = vmul.f32 %v1099, 1.442695
          %v1227 = vpow.pop %v1226
          %v1228 = vadd.f32 %v1101, 1.0
          %v1229 = vadd.f32 %v1103, 1.0
          %v1230 = vadd.f32 %v1105, 1.0
          %v1231 = vadd.f32 %v1107, 1.0
          %v1232 = vadd.f32 %v1109, 1.0
          %v1233 = vadd.f32 %v1111, 1.0
          %v1234 = vadd.f32 %v1113, 1.0
          %v1235 = vadd.f32 %v1115, 1.0
          %v1236 = vadd.f32 %v1117, 1.0
          %v1237 = vadd.f32 %v1119, 1.0
          %v1238 = vadd.f32 %v1121, 1.0
          %v1239 = vadd.f32 %v1123, 1.0
          %v1240 = vadd.f32 %v1125, 1.0
          %v1241 = vadd.f32 %v1127, 1.0
          %v1242 = vadd.f32 %v1129, 1.0
          %v1243 = vadd.f32 %v1131, 1.0
          %v1244 = vadd.f32 %v1133, 1.0
          %v1245 = vadd.f32 %v1135, 1.0
          %v1246 = vadd.f32 %v1137, 1.0
          %v1247 = vadd.f32 %v1139, 1.0
          %v1248 = vadd.f32 %v1141, 1.0
          %v1249 = vadd.f32 %v1143, 1.0
          %v1250 = vadd.f32 %v1145, 1.0
          %v1251 = vadd.f32 %v1147, 1.0
          %v1252 = vadd.f32 %v1149, 1.0
          %v1253 = vadd.f32 %v1151, 1.0
          %v1254 = vadd.f32 %v1153, 1.0
          %v1255 = vadd.f32 %v1155, 1.0
          %v1256 = vadd.f32 %v1157, 1.0
          %v1257 = vadd.f32 %v1159, 1.0
          %v1258 = vadd.f32 %v1161, 1.0
          %v1259 = vadd.f32 %v1163, 1.0
          %v1260 = vadd.f32 %v1165, 1.0
          %v1261 = vadd.f32 %v1167, 1.0
          %v1262 = vadd.f32 %v1169, 1.0
          %v1263 = vadd.f32 %v1171, 1.0
          %v1264 = vadd.f32 %v1173, 1.0
          %v1265 = vadd.f32 %v1175, 1.0
          %v1266 = vadd.f32 %v1177, 1.0
          %v1267 = vadd.f32 %v1179, 1.0
          %v1268 = vadd.f32 %v1181, 1.0
          %v1269 = vadd.f32 %v1183, 1.0
          %v1270 = vadd.f32 %v1185, 1.0
          %v1271 = vadd.f32 %v1187, 1.0
          %v1272 = vadd.f32 %v1189, 1.0
          %v1273 = vadd.f32 %v1191, 1.0
          %v1274 = vadd.f32 %v1193, 1.0
          %v1275 = vadd.f32 %v1195, 1.0
          %v1276 = vadd.f32 %v1197, 1.0
          %v1277 = vadd.f32 %v1199, 1.0
          %v1278 = vadd.f32 %v1201, 1.0
          %v1279 = vadd.f32 %v1203, 1.0
          %v1280 = vadd.f32 %v1205, 1.0
          %v1281 = vadd.f32 %v1207, 1.0
          %v1282 = vadd.f32 %v1209, 1.0
          %v1283 = vadd.f32 %v1211, 1.0
          %v1284 = vadd.f32 %v1213, 1.0
          %v1285 = vadd.f32 %v1215, 1.0
          %v1286 = vadd.f32 %v1217, 1.0
          %v1287 = vadd.f32 %v1219, 1.0
          %v1288 = vadd.f32 %v1221, 1.0
          %v1289 = vadd.f32 %v1223, 1.0
          %v1290 = vadd.f32 %v1225, 1.0
          %v1291 = vadd.f32 %v1227, 1.0
          %v1292 = vrcp.pop %v1228
          %v1293 = vmul.f32 1.0, %v1292
          %v1294 = vrcp.pop %v1229
          %v1295 = vmul.f32 1.0, %v1294
          %v1296 = vrcp.pop %v1230
          %v1297 = vmul.f32 1.0, %v1296
          %v1298 = vrcp.pop %v1231
          %v1299 = vmul.f32 1.0, %v1298
          %v1300 = vrcp.pop %v1232
          %v1301 = vmul.f32 1.0, %v1300
          %v1302 = vrcp.pop %v1233
          %v1303 = vmul.f32 1.0, %v1302
          %v1304 = vrcp.pop %v1234
          %v1305 = vmul.f32 1.0, %v1304
          %v1306 = vrcp.pop %v1235
          %v1307 = vmul.f32 1.0, %v1306
          %v1308 = vrcp.pop %v1236
          %v1309 = vmul.f32 1.0, %v1308
          %v1310 = vrcp.pop %v1237
          %v1311 = vmul.f32 1.0, %v1310
          %v1312 = vrcp.pop %v1238
          %v1313 = vmul.f32 1.0, %v1312
          %v1314 = vrcp.pop %v1239
          %v1315 = vmul.f32 1.0, %v1314
          %v1316 = vrcp.pop %v1240
          %v1317 = vmul.f32 1.0, %v1316
          %v1318 = vrcp.pop %v1241
          %v1319 = vmul.f32 1.0, %v1318
          %v1320 = vrcp.pop %v1242
          %v1321 = vmul.f32 1.0, %v1320
          %v1322 = vrcp.pop %v1243
          %v1323 = vmul.f32 1.0, %v1322
          %v1324 = vrcp.pop %v1244
          %v1325 = vmul.f32 1.0, %v1324
          %v1326 = vrcp.pop %v1245
          %v1327 = vmul.f32 1.0, %v1326
          %v1328 = vrcp.pop %v1246
          %v1329 = vmul.f32 1.0, %v1328
          %v1330 = vrcp.pop %v1247
          %v1331 = vmul.f32 1.0, %v1330
          %v1332 = vrcp.pop %v1248
          %v1333 = vmul.f32 1.0, %v1332
          %v1334 = vrcp.pop %v1249
          %v1335 = vmul.f32 1.0, %v1334
          %v1336 = vrcp.pop %v1250
          %v1337 = vmul.f32 1.0, %v1336
          %v1338 = vrcp.pop %v1251
          %v1339 = vmul.f32 1.0, %v1338
          %v1340 = vrcp.pop %v1252
          %v1341 = vmul.f32 1.0, %v1340
          %v1342 = vrcp.pop %v1253
          %v1343 = vmul.f32 1.0, %v1342
          %v1344 = vrcp.pop %v1254
          %v1345 = vmul.f32 1.0, %v1344
          %v1346 = vrcp.pop %v1255
          %v1347 = vmul.f32 1.0, %v1346
          %v1348 = vrcp.pop %v1256
          %v1349 = vmul.f32 1.0, %v1348
          %v1350 = vrcp.pop %v1257
          %v1351 = vmul.f32 1.0, %v1350
          %v1352 = vrcp.pop %v1258
          %v1353 = vmul.f32 1.0, %v1352
          %v1354 = vrcp.pop %v1259
          %v1355 = vmul.f32 1.0, %v1354
          %v1356 = vrcp.pop %v1260
          %v1357 = vmul.f32 1.0, %v1356
          %v1358 = vrcp.pop %v1261
          %v1359 = vmul.f32 1.0, %v1358
          %v1360 = vrcp.pop %v1262
          %v1361 = vmul.f32 1.0, %v1360
          %v1362 = vrcp.pop %v1263
          %v1363 = vmul.f32 1.0, %v1362
          %v1364 = vrcp.pop %v1264
          %v1365 = vmul.f32 1.0, %v1364
          %v1366 = vrcp.pop %v1265
          %v1367 = vmul.f32 1.0, %v1366
          %v1368 = vrcp.pop %v1266
          %v1369 = vmul.f32 1.0, %v1368
          %v1370 = vrcp.pop %v1267
          %v1371 = vmul.f32 1.0, %v1370
          %v1372 = vrcp.pop %v1268
          %v1373 = vmul.f32 1.0, %v1372
          %v1374 = vrcp.pop %v1269
          %v1375 = vmul.f32 1.0, %v1374
          %v1376 = vrcp.pop %v1270
          %v1377 = vmul.f32 1.0, %v1376
          %v1378 = vrcp.pop %v1271
          %v1379 = vmul.f32 1.0, %v1378
          %v1380 = vrcp.pop %v1272
          %v1381 = vmul.f32 1.0, %v1380
          %v1382 = vrcp.pop %v1273
          %v1383 = vmul.f32 1.0, %v1382
          %v1384 = vrcp.pop %v1274
          %v1385 = vmul.f32 1.0, %v1384
          %v1386 = vrcp.pop %v1275
          %v1387 = vmul.f32 1.0, %v1386
          %v1388 = vrcp.pop %v1276
          %v1389 = vmul.f32 1.0, %v1388
          %v1390 = vrcp.pop %v1277
          %v1391 = vmul.f32 1.0, %v1390
          %v1392 = vrcp.pop %v1278
          %v1393 = vmul.f32 1.0, %v1392
          %v1394 = vrcp.pop %v1279
          %v1395 = vmul.f32 1.0, %v1394
          %v1396 = vrcp.pop %v1280
          %v1397 = vmul.f32 1.0, %v1396
          %v1398 = vrcp.pop %v1281
          %v1399 = vmul.f32 1.0, %v1398
          %v1400 = vrcp.pop %v1282
          %v1401 = vmul.f32 1.0, %v1400
          %v1402 = vrcp.pop %v1283
          %v1403 = vmul.f32 1.0, %v1402
          %v1404 = vrcp.pop %v1284
          %v1405 = vmul.f32 1.0, %v1404
          %v1406 = vrcp.pop %v1285
          %v1407 = vmul.f32 1.0, %v1406
          %v1408 = vrcp.pop %v1286
          %v1409 = vmul.f32 1.0, %v1408
          %v1410 = vrcp.pop %v1287
          %v1411 = vmul.f32 1.0, %v1410
          %v1412 = vrcp.pop %v1288
          %v1413 = vmul.f32 1.0, %v1412
          %v1414 = vrcp.pop %v1289
          %v1415 = vmul.f32 1.0, %v1414
          %v1416 = vrcp.pop %v1290
          %v1417 = vmul.f32 1.0, %v1416
          %v1418 = vrcp.pop %v1291
          %v1419 = vmul.f32 1.0, %v1418
          %v1420 = vmul.f32 %v878, %v1293
          %v1421 = vmul.f32 %v880, %v1295
          %v1422 = vmul.f32 %v882, %v1297
          %v1423 = vmul.f32 %v884, %v1299
          %v1424 = vmul.f32 %v888, %v1301
          %v1425 = vmul.f32 %v890, %v1303
          %v1426 = vmul.f32 %v892, %v1305
          %v1427 = vmul.f32 %v894, %v1307
          %v1428 = vmul.f32 %v898, %v1309
          %v1429 = vmul.f32 %v900, %v1311
          %v1430 = vmul.f32 %v902, %v1313
          %v1431 = vmul.f32 %v904, %v1315
          %v1432 = vmul.f32 %v908, %v1317
          %v1433 = vmul.f32 %v910, %v1319
          %v1434 = vmul.f32 %v912, %v1321
          %v1435 = vmul.f32 %v914, %v1323
          %v1436 = vmul.f32 %v918, %v1325
          %v1437 = vmul.f32 %v920, %v1327
          %v1438 = vmul.f32 %v922, %v1329
          %v1439 = vmul.f32 %v924, %v1331
          %v1440 = vmul.f32 %v928, %v1333
          %v1441 = vmul.f32 %v930, %v1335
          %v1442 = vmul.f32 %v932, %v1337
          %v1443 = vmul.f32 %v934, %v1339
          %v1444 = vmul.f32 %v938, %v1341
          %v1445 = vmul.f32 %v940, %v1343
          %v1446 = vmul.f32 %v942, %v1345
          %v1447 = vmul.f32 %v944, %v1347
          %v1448 = vmul.f32 %v948, %v1349
          %v1449 = vmul.f32 %v950, %v1351
          %v1450 = vmul.f32 %v952, %v1353
          %v1451 = vmul.f32 %v954, %v1355
          %v1452 = vmul.f32 %v958, %v1357
          %v1453 = vmul.f32 %v960, %v1359
          %v1454 = vmul.f32 %v962, %v1361
          %v1455 = vmul.f32 %v964, %v1363
          %v1456 = vmul.f32 %v968, %v1365
          %v1457 = vmul.f32 %v970, %v1367
          %v1458 = vmul.f32 %v972, %v1369
          %v1459 = vmul.f32 %v974, %v1371
          %v1460 = vmul.f32 %v978, %v1373
          %v1461 = vmul.f32 %v980, %v1375
          %v1462 = vmul.f32 %v982, %v1377
          %v1463 = vmul.f32 %v984, %v1379
          %v1464 = vmul.f32 %v988, %v1381
          %v1465 = vmul.f32 %v990, %v1383
          %v1466 = vmul.f32 %v992, %v1385
          %v1467 = vmul.f32 %v994, %v1387
          %v1468 = vmul.f32 %v998, %v1389
          %v1469 = vmul.f32 %v1000, %v1391
          %v1470 = vmul.f32 %v1002, %v1393
          %v1471 = vmul.f32 %v1004, %v1395
          %v1472 = vmul.f32 %v1008, %v1397
          %v1473 = vmul.f32 %v1010, %v1399
          %v1474 = vmul.f32 %v1012, %v1401
          %v1475 = vmul.f32 %v1014, %v1403
          %v1476 = vmul.f32 %v1018, %v1405
          %v1477 = vmul.f32 %v1020, %v1407
          %v1478 = vmul.f32 %v1022, %v1409
          %v1479 = vmul.f32 %v1024, %v1411
          %v1480 = vmul.f32 %v1028, %v1413
          %v1481 = vmul.f32 %v1030, %v1415
          %v1482 = vmul.f32 %v1032, %v1417
          %v1483 = vmul.f32 %v1034, %v1419
          %v1484 = vld [vmem:[%s432] sm:$0xff]
          %v1485 = vld [vmem:[%s432 + $0x8] sm:$0xff]
          %v1486 = vld [vmem:[%s432 + $0x10] sm:$0xff]
          %v1487 = vld [vmem:[%s432 + $0x18] sm:$0xff]
          %v1488 = vld [vmem:[%s432 + $0x20] sm:$0xff]
          %v1489 = vld [vmem:[%s432 + $0x28] sm:$0xff]
          %v1490 = vld [vmem:[%s432 + $0x30] sm:$0xff]
          %v1491 = vld [vmem:[%s432 + $0x38] sm:$0xff]
          %v1492 = vld [vmem:[%s432 + $0x40] sm:$0xff]
          %v1493 = vld [vmem:[%s432 + $0x48] sm:$0xff]
          %v1494 = vld [vmem:[%s432 + $0x50] sm:$0xff]
          %v1495 = vld [vmem:[%s432 + $0x58] sm:$0xff]
          %v1496 = vld [vmem:[%s432 + $0x60] sm:$0xff]
          %v1497 = vld [vmem:[%s432 + $0x68] sm:$0xff]
          %v1498 = vld [vmem:[%s432 + $0x70] sm:$0xff]
          %v1499 = vld [vmem:[%s432 + $0x78] sm:$0xff]
          %v1501 = vlaneseq
          %v1502 = vshrl.u32 %v1501, 7
          %v1503 = vsub.s32 0, %v1502
          %v1504 = vrot.slane %v639, %v1503
          %v1505 = vlaneseq
          %v1506 = vshrl.u32 %v1505, 7
          %v1507 = vsub.s32 1, %v1506
          %v1508 = vrot.slane %v639, %v1507
          %v1527 = vunpack.c.l.b16 %v1484
          %v1528 = vunpack.c.h.b16 %v1484
          %v1529 = vunpack.c.l.b16 %v1485
          %v1530 = vunpack.c.h.b16 %v1485
          %v1531 = vunpack.c.l.b16 %v1486
          %v1532 = vunpack.c.h.b16 %v1486
          %v1533 = vunpack.c.l.b16 %v1487
          %v1534 = vunpack.c.h.b16 %v1487
          %v1535 = vunpack.c.l.b16 %v1488
          %v1536 = vunpack.c.h.b16 %v1488
          %v1537 = vunpack.c.l.b16 %v1489
          %v1538 = vunpack.c.h.b16 %v1489
          %v1539 = vunpack.c.l.b16 %v1490
          %v1540 = vunpack.c.h.b16 %v1490
          %v1541 = vunpack.c.l.b16 %v1491
          %v1542 = vunpack.c.h.b16 %v1491
          %v1543 = vunpack.c.l.b16 %v1492
          %v1544 = vunpack.c.h.b16 %v1492
          %v1545 = vunpack.c.l.b16 %v1493
          %v1546 = vunpack.c.h.b16 %v1493
          %v1547 = vunpack.c.l.b16 %v1494
          %v1548 = vunpack.c.h.b16 %v1494
          %v1549 = vunpack.c.l.b16 %v1495
          %v1550 = vunpack.c.h.b16 %v1495
          %v1551 = vunpack.c.l.b16 %v1496
          %v1552 = vunpack.c.h.b16 %v1496
          %v1553 = vunpack.c.l.b16 %v1497
          %v1554 = vunpack.c.h.b16 %v1497
          %v1555 = vunpack.c.l.b16 %v1498
          %v1556 = vunpack.c.h.b16 %v1498
          %v1557 = vunpack.c.l.b16 %v1499
          %v1558 = vunpack.c.h.b16 %v1499
          %v1559 = vpack.c.b16 %v1529, %v1527
          %v1560 = vpack.c.b16 %v1530, %v1528
          %v1561 = vpack.c.b16 %v1533, %v1531
          %v1562 = vpack.c.b16 %v1534, %v1532
          %v1563 = vpack.c.b16 %v1537, %v1535
          %v1564 = vpack.c.b16 %v1538, %v1536
          %v1565 = vpack.c.b16 %v1541, %v1539
          %v1566 = vpack.c.b16 %v1542, %v1540
          %v1567 = vpack.c.b16 %v1545, %v1543
          %v1568 = vpack.c.b16 %v1546, %v1544
          %v1569 = vpack.c.b16 %v1549, %v1547
          %v1570 = vpack.c.b16 %v1550, %v1548
          %v1571 = vpack.c.b16 %v1553, %v1551
          %v1572 = vpack.c.b16 %v1554, %v1552
          %v1573 = vpack.c.b16 %v1557, %v1555
          %v1574 = vpack.c.b16 %v1558, %v1556
          %1591 = vmatprep.subr.bf16.mxu0 %v1560
          %1592 = vmatpush1.bf16.msra.mxu0 %v1559
          %1593 = vmatprep.subr.bf16.mxu0 %v1562
          %1594 = vmatpush1.bf16.msra.mxu0 %v1561
          %1595 = vmatprep.subr.bf16.mxu0 %v1564
          %1596 = vmatpush1.bf16.msra.mxu0 %v1563
          %1597 = vmatprep.subr.bf16.mxu0 %v1566
          %1598 = vmatpush1.bf16.msra.mxu0 %v1565
          %1599 = vmatprep.subr.bf16.mxu0 %v1568
          %1600 = vmatpush1.bf16.msra.mxu0 %v1567
          %1601 = vmatprep.subr.bf16.mxu0 %v1570
          %1602 = vmatpush1.bf16.msra.mxu0 %v1569
          %1603 = vmatprep.subr.bf16.mxu0 %v1572
          %1604 = vmatpush1.bf16.msra.mxu0 %v1571
          %1605 = vmatprep.subr.bf16.mxu0 %v1574
          %1606 = vmatpush1.bf16.msra.mxu0 %v1573
          %1607 = vmatprep.subr.bf16.mxu0 0
          %1608 = vmatpush1.bf16.msra.mxu0 0
          %1609 = vmatprep.subr.bf16.mxu0 0
          %1610 = vmatpush1.bf16.msra.mxu0 0
          %1611 = vmatprep.subr.bf16.mxu0 0
          %1612 = vmatpush1.bf16.msra.mxu0 0
          %1613 = vmatprep.subr.bf16.mxu0 0
          %1614 = vmatpush1.bf16.msra.mxu0 0
          %1615 = vmatprep.subr.bf16.mxu0 0
          %1616 = vmatpush1.bf16.msra.mxu0 0
          %1617 = vmatprep.subr.bf16.mxu0 0
          %1618 = vmatpush1.bf16.msra.mxu0 0
          %1619 = vmatprep.subr.bf16.mxu0 0
          %1620 = vmatpush1.bf16.msra.mxu0 0
          %1621 = vmatprep.subr.bf16.mxu0 0
          %1622 = vmatpush1.bf16.msra.mxu0 0
          %1623 = vmatprep.mubr.bf16.mxu0 0
          %1624 = vmatmul.mubr.bf16.gmra.mrb[0].mxu0 %v731
          %v1625 = vpop.f32.mrb[0].mxu0
          %v1626 = vadd.f32 %v1504, %v1625
          %v1627 = vpop.f32.mrb[0].mxu0
          %v1628 = vadd.f32 %v1508, %v1627
          %v1629 = vpop.f32.mrb[0].mxu0
          %v1630 = vadd.f32 %v1504, %v1629
          %v1631 = vpop.f32.mrb[0].mxu0
          %v1632 = vadd.f32 %v1508, %v1631
          %1633 = vmatprep.mubr.bf16.mxu0 0
          %1634 = vmatmul.mubr.bf16.gmra.mrb[0].mxu0 %v732
          %v1635 = vpop.f32.mrb[0].mxu0
          %v1636 = vadd.f32 %v1504, %v1635
          %v1637 = vpop.f32.mrb[0].mxu0
          %v1638 = vadd.f32 %v1508, %v1637
          %v1639 = vpop.f32.mrb[0].mxu0
          %v1640 = vadd.f32 %v1504, %v1639
          %v1641 = vpop.f32.mrb[0].mxu0
          %v1642 = vadd.f32 %v1508, %v1641
          %1643 = vmatprep.mubr.bf16.mxu0 0
          %1644 = vmatmul.mubr.bf16.gmra.mrb[0].mxu0 %v733
          %v1645 = vpop.f32.mrb[0].mxu0
          %v1646 = vadd.f32 %v1504, %v1645
          %v1647 = vpop.f32.mrb[0].mxu0
          %v1648 = vadd.f32 %v1508, %v1647
          %v1649 = vpop.f32.mrb[0].mxu0
          %v1650 = vadd.f32 %v1504, %v1649
          %v1651 = vpop.f32.mrb[0].mxu0
          %v1652 = vadd.f32 %v1508, %v1651
          %1653 = vmatprep.mubr.bf16.mxu0 0
          %1654 = vmatmul.mubr.bf16.gmra.mrb[0].mxu0 %v734
          %v1655 = vpop.f32.mrb[0].mxu0
          %v1656 = vadd.f32 %v1504, %v1655
          %v1657 = vpop.f32.mrb[0].mxu0
          %v1658 = vadd.f32 %v1508, %v1657
          %v1659 = vpop.f32.mrb[0].mxu0
          %v1660 = vadd.f32 %v1504, %v1659
          %v1661 = vpop.f32.mrb[0].mxu0
          %v1662 = vadd.f32 %v1508, %v1661
          %1663 = vmatprep.mubr.bf16.mxu0 0
          %1664 = vmatmul.mubr.bf16.gmra.mrb[0].mxu0 %v735
          %v1665 = vpop.f32.mrb[0].mxu0
          %v1666 = vadd.f32 %v1504, %v1665
          %v1667 = vpop.f32.mrb[0].mxu0
          %v1668 = vadd.f32 %v1508, %v1667
          %v1669 = vpop.f32.mrb[0].mxu0
          %v1670 = vadd.f32 %v1504, %v1669
          %v1671 = vpop.f32.mrb[0].mxu0
          %v1672 = vadd.f32 %v1508, %v1671
          %1673 = vmatprep.mubr.bf16.mxu0 0
          %1674 = vmatmul.mubr.bf16.gmra.mrb[0].mxu0 %v736
          %v1675 = vpop.f32.mrb[0].mxu0
          %v1676 = vadd.f32 %v1504, %v1675
          %v1677 = vpop.f32.mrb[0].mxu0
          %v1678 = vadd.f32 %v1508, %v1677
          %v1679 = vpop.f32.mrb[0].mxu0
          %v1680 = vadd.f32 %v1504, %v1679
          %v1681 = vpop.f32.mrb[0].mxu0
          %v1682 = vadd.f32 %v1508, %v1681
          %1683 = vmatprep.mubr.bf16.mxu0 0
          %1684 = vmatmul.mubr.bf16.gmra.mrb[0].mxu0 %v737
          %v1685 = vpop.f32.mrb[0].mxu0
          %v1686 = vadd.f32 %v1504, %v1685
          %v1687 = vpop.f32.mrb[0].mxu0
          %v1688 = vadd.f32 %v1508, %v1687
          %v1689 = vpop.f32.mrb[0].mxu0
          %v1690 = vadd.f32 %v1504, %v1689
          %v1691 = vpop.f32.mrb[0].mxu0
          %v1692 = vadd.f32 %v1508, %v1691
          %1693 = vmatprep.mubr.bf16.mxu0 0
          %1694 = vmatmul.mubr.bf16.gmra.mrb[0].mxu0 %v738
          %v1695 = vpop.f32.mrb[0].mxu0
          %v1696 = vadd.f32 %v1504, %v1695
          %v1697 = vpop.f32.mrb[0].mxu0
          %v1698 = vadd.f32 %v1508, %v1697
          %v1699 = vpop.f32.mrb[0].mxu0
          %v1700 = vadd.f32 %v1504, %v1699
          %v1701 = vpop.f32.mrb[0].mxu0
          %v1702 = vadd.f32 %v1508, %v1701
          %1703 = vmatprep.mubr.bf16.mxu0 0
          %1704 = vmatmul.mubr.bf16.gmra.mrb[0].mxu0 %v739
          %v1705 = vpop.f32.mrb[0].mxu0
          %v1706 = vadd.f32 %v1504, %v1705
          %v1707 = vpop.f32.mrb[0].mxu0
          %v1708 = vadd.f32 %v1508, %v1707
          %v1709 = vpop.f32.mrb[0].mxu0
          %v1710 = vadd.f32 %v1504, %v1709
          %v1711 = vpop.f32.mrb[0].mxu0
          %v1712 = vadd.f32 %v1508, %v1711
          %1713 = vmatprep.mubr.bf16.mxu0 0
          %1714 = vmatmul.mubr.bf16.gmra.mrb[0].mxu0 %v740
          %v1715 = vpop.f32.mrb[0].mxu0
          %v1716 = vadd.f32 %v1504, %v1715
          %v1717 = vpop.f32.mrb[0].mxu0
          %v1718 = vadd.f32 %v1508, %v1717
          %v1719 = vpop.f32.mrb[0].mxu0
          %v1720 = vadd.f32 %v1504, %v1719
          %v1721 = vpop.f32.mrb[0].mxu0
          %v1722 = vadd.f32 %v1508, %v1721
          %1723 = vmatprep.mubr.bf16.mxu0 0
          %1724 = vmatmul.mubr.bf16.gmra.mrb[0].mxu0 %v741
          %v1725 = vpop.f32.mrb[0].mxu0
          %v1726 = vadd.f32 %v1504, %v1725
          %v1727 = vpop.f32.mrb[0].mxu0
          %v1728 = vadd.f32 %v1508, %v1727
          %v1729 = vpop.f32.mrb[0].mxu0
          %v1730 = vadd.f32 %v1504, %v1729
          %v1731 = vpop.f32.mrb[0].mxu0
          %v1732 = vadd.f32 %v1508, %v1731
          %1733 = vmatprep.mubr.bf16.mxu0 0
          %1734 = vmatmul.mubr.bf16.gmra.mrb[0].mxu0 %v742
          %v1735 = vpop.f32.mrb[0].mxu0
          %v1736 = vadd.f32 %v1504, %v1735
          %v1737 = vpop.f32.mrb[0].mxu0
          %v1738 = vadd.f32 %v1508, %v1737
          %v1739 = vpop.f32.mrb[0].mxu0
          %v1740 = vadd.f32 %v1504, %v1739
          %v1741 = vpop.f32.mrb[0].mxu0
          %v1742 = vadd.f32 %v1508, %v1741
          %1743 = vmatprep.mubr.bf16.mxu0 0
          %1744 = vmatmul.mubr.bf16.gmra.mrb[0].mxu0 %v743
          %v1745 = vpop.f32.mrb[0].mxu0
          %v1746 = vadd.f32 %v1504, %v1745
          %v1747 = vpop.f32.mrb[0].mxu0
          %v1748 = vadd.f32 %v1508, %v1747
          %v1749 = vpop.f32.mrb[0].mxu0
          %v1750 = vadd.f32 %v1504, %v1749
          %v1751 = vpop.f32.mrb[0].mxu0
          %v1752 = vadd.f32 %v1508, %v1751
          %1753 = vmatprep.mubr.bf16.mxu0 0
          %1754 = vmatmul.mubr.bf16.gmra.mrb[0].mxu0 %v744
          %v1755 = vpop.f32.mrb[0].mxu0
          %v1756 = vadd.f32 %v1504, %v1755
          %v1757 = vpop.f32.mrb[0].mxu0
          %v1758 = vadd.f32 %v1508, %v1757
          %v1759 = vpop.f32.mrb[0].mxu0
          %v1760 = vadd.f32 %v1504, %v1759
          %v1761 = vpop.f32.mrb[0].mxu0
          %v1762 = vadd.f32 %v1508, %v1761
          %1763 = vmatprep.mubr.bf16.mxu0 0
          %1764 = vmatmul.mubr.bf16.gmra.mrb[0].mxu0 %v745
          %v1765 = vpop.f32.mrb[0].mxu0
          %v1766 = vadd.f32 %v1504, %v1765
          %v1767 = vpop.f32.mrb[0].mxu0
          %v1768 = vadd.f32 %v1508, %v1767
          %v1769 = vpop.f32.mrb[0].mxu0
          %v1770 = vadd.f32 %v1504, %v1769
          %v1771 = vpop.f32.mrb[0].mxu0
          %v1772 = vadd.f32 %v1508, %v1771
          %1773 = vmatprep.mubr.bf16.mxu0 0
          %1774 = vmatmul.mubr.bf16.gmra.mrb[0].mxu0 %v746
          %v1775 = vpop.f32.mrb[0].mxu0
          %v1776 = vadd.f32 %v1504, %v1775
          %v1777 = vpop.f32.mrb[0].mxu0
          %v1778 = vadd.f32 %v1508, %v1777
          %v1779 = vpop.f32.mrb[0].mxu0
          %v1780 = vadd.f32 %v1504, %v1779
          %v1781 = vpop.f32.mrb[0].mxu0
          %v1782 = vadd.f32 %v1508, %v1781
          %1783 = vdwg.mxu0
          %v1784 = vmul.f32 %v1420, %v1626
          %v1785 = vmul.f32 %v1421, %v1628
          %v1786 = vmul.f32 %v1422, %v1630
          %v1787 = vmul.f32 %v1423, %v1632
          %v1788 = vmul.f32 %v1424, %v1636
          %v1789 = vmul.f32 %v1425, %v1638
          %v1790 = vmul.f32 %v1426, %v1640
          %v1791 = vmul.f32 %v1427, %v1642
          %v1792 = vmul.f32 %v1428, %v1646
          %v1793 = vmul.f32 %v1429, %v1648
          %v1794 = vmul.f32 %v1430, %v1650
          %v1795 = vmul.f32 %v1431, %v1652
          %v1796 = vmul.f32 %v1432, %v1656
          %v1797 = vmul.f32 %v1433, %v1658
          %v1798 = vmul.f32 %v1434, %v1660
          %v1799 = vmul.f32 %v1435, %v1662
          %v1800 = vmul.f32 %v1436, %v1666
          %v1801 = vmul.f32 %v1437, %v1668
          %v1802 = vmul.f32 %v1438, %v1670
          %v1803 = vmul.f32 %v1439, %v1672
          %v1804 = vmul.f32 %v1440, %v1676
          %v1805 = vmul.f32 %v1441, %v1678
          %v1806 = vmul.f32 %v1442, %v1680
          %v1807 = vmul.f32 %v1443, %v1682
          %v1808 = vmul.f32 %v1444, %v1686
          %v1809 = vmul.f32 %v1445, %v1688
          %v1810 = vmul.f32 %v1446, %v1690
          %v1811 = vmul.f32 %v1447, %v1692
          %v1812 = vmul.f32 %v1448, %v1696
          %v1813 = vmul.f32 %v1449, %v1698
          %v1814 = vmul.f32 %v1450, %v1700
          %v1815 = vmul.f32 %v1451, %v1702
          %v1816 = vmul.f32 %v1452, %v1706
          %v1817 = vmul.f32 %v1453, %v1708
          %v1818 = vmul.f32 %v1454, %v1710
          %v1819 = vmul.f32 %v1455, %v1712
          %v1820 = vmul.f32 %v1456, %v1716
          %v1821 = vmul.f32 %v1457, %v1718
          %v1822 = vmul.f32 %v1458, %v1720
          %v1823 = vmul.f32 %v1459, %v1722
          %v1824 = vmul.f32 %v1460, %v1726
          %v1825 = vmul.f32 %v1461, %v1728
          %v1826 = vmul.f32 %v1462, %v1730
          %v1827 = vmul.f32 %v1463, %v1732
          %v1828 = vmul.f32 %v1464, %v1736
          %v1829 = vmul.f32 %v1465, %v1738
          %v1830 = vmul.f32 %v1466, %v1740
          %v1831 = vmul.f32 %v1467, %v1742
          %v1832 = vmul.f32 %v1468, %v1746
          %v1833 = vmul.f32 %v1469, %v1748
          %v1834 = vmul.f32 %v1470, %v1750
          %v1835 = vmul.f32 %v1471, %v1752
          %v1836 = vmul.f32 %v1472, %v1756
          %v1837 = vmul.f32 %v1473, %v1758
          %v1838 = vmul.f32 %v1474, %v1760
          %v1839 = vmul.f32 %v1475, %v1762
          %v1840 = vmul.f32 %v1476, %v1766
          %v1841 = vmul.f32 %v1477, %v1768
          %v1842 = vmul.f32 %v1478, %v1770
          %v1843 = vmul.f32 %v1479, %v1772
          %v1844 = vmul.f32 %v1480, %v1776
          %v1845 = vmul.f32 %v1481, %v1778
          %v1846 = vmul.f32 %v1482, %v1780
          %v1847 = vmul.f32 %v1483, %v1782
          %v1848 = vpack.c.bf16 %v1786, %v1784
          %v1849 = vpack.c.bf16 %v1787, %v1785
          %v1850 = vpack.c.bf16 %v1790, %v1788
          %v1851 = vpack.c.bf16 %v1791, %v1789
          %v1852 = vpack.c.bf16 %v1794, %v1792
          %v1853 = vpack.c.bf16 %v1795, %v1793
          %v1854 = vpack.c.bf16 %v1798, %v1796
          %v1855 = vpack.c.bf16 %v1799, %v1797
          %v1856 = vpack.c.bf16 %v1802, %v1800
          %v1857 = vpack.c.bf16 %v1803, %v1801
          %v1858 = vpack.c.bf16 %v1806, %v1804
          %v1859 = vpack.c.bf16 %v1807, %v1805
          %v1860 = vpack.c.bf16 %v1810, %v1808
          %v1861 = vpack.c.bf16 %v1811, %v1809
          %v1862 = vpack.c.bf16 %v1814, %v1812
          %v1863 = vpack.c.bf16 %v1815, %v1813
          %v1864 = vpack.c.bf16 %v1818, %v1816
          %v1865 = vpack.c.bf16 %v1819, %v1817
          %v1866 = vpack.c.bf16 %v1822, %v1820
          %v1867 = vpack.c.bf16 %v1823, %v1821
          %v1868 = vpack.c.bf16 %v1826, %v1824
          %v1869 = vpack.c.bf16 %v1827, %v1825
          %v1870 = vpack.c.bf16 %v1830, %v1828
          %v1871 = vpack.c.bf16 %v1831, %v1829
          %v1872 = vpack.c.bf16 %v1834, %v1832
          %v1873 = vpack.c.bf16 %v1835, %v1833
          %v1874 = vpack.c.bf16 %v1838, %v1836
          %v1875 = vpack.c.bf16 %v1839, %v1837
          %v1876 = vpack.c.bf16 %v1842, %v1840
          %v1877 = vpack.c.bf16 %v1843, %v1841
          %v1878 = vpack.c.bf16 %v1846, %v1844
          %v1879 = vpack.c.bf16 %v1847, %v1845
          %v1880 = vld [vmem:[#allocation2] sm:$0xff]
          %v1881 = vld [vmem:[#allocation2 + $0x8] sm:$0xff]
          %v1882 = vld [vmem:[#allocation2 + $0x10] sm:$0xff]
          %v1883 = vld [vmem:[#allocation2 + $0x18] sm:$0xff]
          %v1884 = vld [vmem:[#allocation2 + $0x20] sm:$0xff]
          %v1885 = vld [vmem:[#allocation2 + $0x28] sm:$0xff]
          %v1886 = vld [vmem:[#allocation2 + $0x30] sm:$0xff]
          %v1887 = vld [vmem:[#allocation2 + $0x38] sm:$0xff]
          %v1888 = vld [vmem:[#allocation2 + $0x40] sm:$0xff]
          %v1889 = vld [vmem:[#allocation2 + $0x48] sm:$0xff]
          %v1890 = vld [vmem:[#allocation2 + $0x50] sm:$0xff]
          %v1891 = vld [vmem:[#allocation2 + $0x58] sm:$0xff]
          %v1892 = vld [vmem:[#allocation2 + $0x60] sm:$0xff]
          %v1893 = vld [vmem:[#allocation2 + $0x68] sm:$0xff]
          %v1894 = vld [vmem:[#allocation2 + $0x70] sm:$0xff]
          %v1895 = vld [vmem:[#allocation2 + $0x78] sm:$0xff]
          %v1896 = vld [vmem:[#allocation2 + $0x80] sm:$0xff]
          %v1897 = vld [vmem:[#allocation2 + $0x88] sm:$0xff]
          %v1898 = vld [vmem:[#allocation2 + $0x90] sm:$0xff]
          %v1899 = vld [vmem:[#allocation2 + $0x98] sm:$0xff]
          %v1900 = vld [vmem:[#allocation2 + $0xa0] sm:$0xff]
          %v1901 = vld [vmem:[#allocation2 + $0xa8] sm:$0xff]
          %v1902 = vld [vmem:[#allocation2 + $0xb0] sm:$0xff]
          %v1903 = vld [vmem:[#allocation2 + $0xb8] sm:$0xff]
          %v1904 = vld [vmem:[#allocation2 + $0xc0] sm:$0xff]
          %v1905 = vld [vmem:[#allocation2 + $0xc8] sm:$0xff]
          %v1906 = vld [vmem:[#allocation2 + $0xd0] sm:$0xff]
          %v1907 = vld [vmem:[#allocation2 + $0xd8] sm:$0xff]
          %v1908 = vld [vmem:[#allocation2 + $0xe0] sm:$0xff]
          %v1909 = vld [vmem:[#allocation2 + $0xe8] sm:$0xff]
          %v1910 = vld [vmem:[#allocation2 + $0xf0] sm:$0xff]
          %v1911 = vld [vmem:[#allocation2 + $0xf8] sm:$0xff]
          %v1912 = vld [vmem:[%s441] sm:$0xf]
          %v1913 = vld [vmem:[%s441 + $0x4] sm:$0xf]
          %v1914 = vld [vmem:[%s441 + $0x8] sm:$0xf]
          %v1915 = vld [vmem:[%s441 + $0xc] sm:$0xf]
          %v1916 = vld [vmem:[%s441 + $0x10] sm:$0xf]
          %v1917 = vld [vmem:[%s441 + $0x14] sm:$0xf]
          %v1918 = vld [vmem:[%s441 + $0x18] sm:$0xf]
          %v1919 = vld [vmem:[%s441 + $0x1c] sm:$0xf]
          %v1920 = vld [vmem:[%s441 + $0x20] sm:$0xf]
          %v1921 = vld [vmem:[%s441 + $0x24] sm:$0xf]
          %v1922 = vld [vmem:[%s441 + $0x28] sm:$0xf]
          %v1923 = vld [vmem:[%s441 + $0x2c] sm:$0xf]
          %v1924 = vld [vmem:[%s441 + $0x30] sm:$0xf]
          %v1925 = vld [vmem:[%s441 + $0x34] sm:$0xf]
          %v1926 = vld [vmem:[%s441 + $0x38] sm:$0xf]
          %v1927 = vld [vmem:[%s441 + $0x3c] sm:$0xf]
          %v1928 = vld [vmem:[%s441 + $0x40] sm:$0xf]
          %v1929 = vld [vmem:[%s441 + $0x44] sm:$0xf]
          %v1930 = vld [vmem:[%s441 + $0x48] sm:$0xf]
          %v1931 = vld [vmem:[%s441 + $0x4c] sm:$0xf]
          %v1932 = vld [vmem:[%s441 + $0x50] sm:$0xf]
          %v1933 = vld [vmem:[%s441 + $0x54] sm:$0xf]
          %v1934 = vld [vmem:[%s441 + $0x58] sm:$0xf]
          %v1935 = vld [vmem:[%s441 + $0x5c] sm:$0xf]
          %v1936 = vld [vmem:[%s441 + $0x60] sm:$0xf]
          %v1937 = vld [vmem:[%s441 + $0x64] sm:$0xf]
          %v1938 = vld [vmem:[%s441 + $0x68] sm:$0xf]
          %v1939 = vld [vmem:[%s441 + $0x6c] sm:$0xf]
          %v1940 = vld [vmem:[%s441 + $0x70] sm:$0xf]
          %v1941 = vld [vmem:[%s441 + $0x74] sm:$0xf]
          %v1942 = vld [vmem:[%s441 + $0x78] sm:$0xf]
          %v1943 = vld [vmem:[%s441 + $0x7c] sm:$0xf]
          %v1976 = vunpack.c.l.b16 %v1912
          %v1977 = vunpack.c.l.b16 %v1913
          %v1978 = vunpack.c.l.b16 %v1914
          %v1979 = vunpack.c.l.b16 %v1915
          %v1980 = vunpack.c.l.b16 %v1916
          %v1981 = vunpack.c.l.b16 %v1917
          %v1982 = vunpack.c.l.b16 %v1918
          %v1983 = vunpack.c.l.b16 %v1919
          %v1984 = vunpack.c.l.b16 %v1920
          %v1985 = vunpack.c.l.b16 %v1921
          %v1986 = vunpack.c.l.b16 %v1922
          %v1987 = vunpack.c.l.b16 %v1923
          %v1988 = vunpack.c.l.b16 %v1924
          %v1989 = vunpack.c.l.b16 %v1925
          %v1990 = vunpack.c.l.b16 %v1926
          %v1991 = vunpack.c.l.b16 %v1927
          %v1992 = vunpack.c.l.b16 %v1928
          %v1993 = vunpack.c.l.b16 %v1929
          %v1994 = vunpack.c.l.b16 %v1930
          %v1995 = vunpack.c.l.b16 %v1931
          %v1996 = vunpack.c.l.b16 %v1932
          %v1997 = vunpack.c.l.b16 %v1933
          %v1998 = vunpack.c.l.b16 %v1934
          %v1999 = vunpack.c.l.b16 %v1935
          %v2000 = vunpack.c.l.b16 %v1936
          %v2001 = vunpack.c.l.b16 %v1937
          %v2002 = vunpack.c.l.b16 %v1938
          %v2003 = vunpack.c.l.b16 %v1939
          %v2004 = vunpack.c.l.b16 %v1940
          %v2005 = vunpack.c.l.b16 %v1941
          %v2006 = vunpack.c.l.b16 %v1942
          %v2007 = vunpack.c.l.b16 %v1943
          %v2008 = vpack.c.b16 %v1977, %v1976
          %v2009 = vpack.c.b16 %v1979, %v1978
          %v2010 = vpack.c.b16 %v1981, %v1980
          %v2011 = vpack.c.b16 %v1983, %v1982
          %v2012 = vpack.c.b16 %v1985, %v1984
          %v2013 = vpack.c.b16 %v1987, %v1986
          %v2014 = vpack.c.b16 %v1989, %v1988
          %v2015 = vpack.c.b16 %v1991, %v1990
          %v2016 = vpack.c.b16 %v1993, %v1992
          %v2017 = vpack.c.b16 %v1995, %v1994
          %v2018 = vpack.c.b16 %v1997, %v1996
          %v2019 = vpack.c.b16 %v1999, %v1998
          %v2020 = vpack.c.b16 %v2001, %v2000
          %v2021 = vpack.c.b16 %v2003, %v2002
          %v2022 = vpack.c.b16 %v2005, %v2004
          %v2023 = vpack.c.b16 %v2007, %v2006
          %2040 = vmatprep.subr.bf16.mxu0 0
          %2041 = vmatpush1.bf16.msra.mxu0 %v2008
          %2042 = vmatprep.subr.bf16.mxu0 0
          %2043 = vmatpush1.bf16.msra.mxu0 %v2009
          %2044 = vmatprep.subr.bf16.mxu0 0
          %2045 = vmatpush1.bf16.msra.mxu0 %v2010
          %2046 = vmatprep.subr.bf16.mxu0 0
          %2047 = vmatpush1.bf16.msra.mxu0 %v2011
          %2048 = vmatprep.subr.bf16.mxu0 0
          %2049 = vmatpush1.bf16.msra.mxu0 %v2012
          %2050 = vmatprep.subr.bf16.mxu0 0
          %2051 = vmatpush1.bf16.msra.mxu0 %v2013
          %2052 = vmatprep.subr.bf16.mxu0 0
          %2053 = vmatpush1.bf16.msra.mxu0 %v2014
          %2054 = vmatprep.subr.bf16.mxu0 0
          %2055 = vmatpush1.bf16.msra.mxu0 %v2015
          %2056 = vmatprep.subr.bf16.mxu0 0
          %2057 = vmatpush1.bf16.msra.mxu0 %v2016
          %2058 = vmatprep.subr.bf16.mxu0 0
          %2059 = vmatpush1.bf16.msra.mxu0 %v2017
          %2060 = vmatprep.subr.bf16.mxu0 0
          %2061 = vmatpush1.bf16.msra.mxu0 %v2018
          %2062 = vmatprep.subr.bf16.mxu0 0
          %2063 = vmatpush1.bf16.msra.mxu0 %v2019
          %2064 = vmatprep.subr.bf16.mxu0 0
          %2065 = vmatpush1.bf16.msra.mxu0 %v2020
          %2066 = vmatprep.subr.bf16.mxu0 0
          %2067 = vmatpush1.bf16.msra.mxu0 %v2021
          %2068 = vmatprep.subr.bf16.mxu0 0
          %2069 = vmatpush1.bf16.msra.mxu0 %v2022
          %2070 = vmatprep.subr.bf16.mxu0 0
          %2071 = vmatpush1.bf16.msra.mxu0 %v2023
          %2072 = vmatprep.mubr.bf16.mxu0 %v1849
          %2073 = vmatmul.mubr.bf16.gmra.mrb[0].mxu0 %v1848
          %v2074 = vpop.f32.mrb[0].mxu0
          %v2075 = vadd.f32 0.0, %v2074
          %v2076 = vpop.f32.mrb[0].mxu0
          %v2077 = vpop.f32.mrb[0].mxu0
          %v2078 = vadd.f32 0.0, %v2077
          %v2079 = vpop.f32.mrb[0].mxu0
          %2080 = vmatprep.mubr.bf16.mxu0 %v1851
          %2081 = vmatmul.mubr.bf16.gmra.mrb[0].mxu0 %v1850
          %v2082 = vpop.f32.mrb[0].mxu0
          %v2083 = vadd.f32 0.0, %v2082
          %v2084 = vpop.f32.mrb[0].mxu0
          %v2085 = vpop.f32.mrb[0].mxu0
          %v2086 = vadd.f32 0.0, %v2085
          %v2087 = vpop.f32.mrb[0].mxu0
          %2088 = vmatprep.mubr.bf16.mxu0 %v1853
          %2089 = vmatmul.mubr.bf16.gmra.mrb[0].mxu0 %v1852
          %v2090 = vpop.f32.mrb[0].mxu0
          %v2091 = vadd.f32 0.0, %v2090
          %v2092 = vpop.f32.mrb[0].mxu0
          %v2093 = vpop.f32.mrb[0].mxu0
          %v2094 = vadd.f32 0.0, %v2093
          %v2095 = vpop.f32.mrb[0].mxu0
          %2096 = vmatprep.mubr.bf16.mxu0 %v1855
          %2097 = vmatmul.mubr.bf16.gmra.mrb[0].mxu0 %v1854
          %v2098 = vpop.f32.mrb[0].mxu0
          %v2099 = vadd.f32 0.0, %v2098
          %v2100 = vpop.f32.mrb[0].mxu0
          %v2101 = vpop.f32.mrb[0].mxu0
          %v2102 = vadd.f32 0.0, %v2101
          %v2103 = vpop.f32.mrb[0].mxu0
          %2104 = vmatprep.mubr.bf16.mxu0 %v1857
          %2105 = vmatmul.mubr.bf16.gmra.mrb[0].mxu0 %v1856
          %v2106 = vpop.f32.mrb[0].mxu0
          %v2107 = vadd.f32 0.0, %v2106
          %v2108 = vpop.f32.mrb[0].mxu0
          %v2109 = vpop.f32.mrb[0].mxu0
          %v2110 = vadd.f32 0.0, %v2109
          %v2111 = vpop.f32.mrb[0].mxu0
          %2112 = vmatprep.mubr.bf16.mxu0 %v1859
          %2113 = vmatmul.mubr.bf16.gmra.mrb[0].mxu0 %v1858
          %v2114 = vpop.f32.mrb[0].mxu0
          %v2115 = vadd.f32 0.0, %v2114
          %v2116 = vpop.f32.mrb[0].mxu0
          %v2117 = vpop.f32.mrb[0].mxu0
          %v2118 = vadd.f32 0.0, %v2117
          %v2119 = vpop.f32.mrb[0].mxu0
          %2120 = vmatprep.mubr.bf16.mxu0 %v1861
          %2121 = vmatmul.mubr.bf16.gmra.mrb[0].mxu0 %v1860
          %v2122 = vpop.f32.mrb[0].mxu0
          %v2123 = vadd.f32 0.0, %v2122
          %v2124 = vpop.f32.mrb[0].mxu0
          %v2125 = vpop.f32.mrb[0].mxu0
          %v2126 = vadd.f32 0.0, %v2125
          %v2127 = vpop.f32.mrb[0].mxu0
          %2128 = vmatprep.mubr.bf16.mxu0 %v1863
          %2129 = vmatmul.mubr.bf16.gmra.mrb[0].mxu0 %v1862
          %v2130 = vpop.f32.mrb[0].mxu0
          %v2131 = vadd.f32 0.0, %v2130
          %v2132 = vpop.f32.mrb[0].mxu0
          %v2133 = vpop.f32.mrb[0].mxu0
          %v2134 = vadd.f32 0.0, %v2133
          %v2135 = vpop.f32.mrb[0].mxu0
          %2136 = vmatprep.mubr.bf16.mxu0 %v1865
          %2137 = vmatmul.mubr.bf16.gmra.mrb[0].mxu0 %v1864
          %v2138 = vpop.f32.mrb[0].mxu0
          %v2139 = vadd.f32 0.0, %v2138
          %v2140 = vpop.f32.mrb[0].mxu0
          %v2141 = vpop.f32.mrb[0].mxu0
          %v2142 = vadd.f32 0.0, %v2141
          %v2143 = vpop.f32.mrb[0].mxu0
          %2144 = vmatprep.mubr.bf16.mxu0 %v1867
          %2145 = vmatmul.mubr.bf16.gmra.mrb[0].mxu0 %v1866
          %v2146 = vpop.f32.mrb[0].mxu0
          %v2147 = vadd.f32 0.0, %v2146
          %v2148 = vpop.f32.mrb[0].mxu0
          %v2149 = vpop.f32.mrb[0].mxu0
          %v2150 = vadd.f32 0.0, %v2149
          %v2151 = vpop.f32.mrb[0].mxu0
          %2152 = vmatprep.mubr.bf16.mxu0 %v1869
          %2153 = vmatmul.mubr.bf16.gmra.mrb[0].mxu0 %v1868
          %v2154 = vpop.f32.mrb[0].mxu0
          %v2155 = vadd.f32 0.0, %v2154
          %v2156 = vpop.f32.mrb[0].mxu0
          %v2157 = vpop.f32.mrb[0].mxu0
          %v2158 = vadd.f32 0.0, %v2157
          %v2159 = vpop.f32.mrb[0].mxu0
          %2160 = vmatprep.mubr.bf16.mxu0 %v1871
          %2161 = vmatmul.mubr.bf16.gmra.mrb[0].mxu0 %v1870
          %v2162 = vpop.f32.mrb[0].mxu0
          %v2163 = vadd.f32 0.0, %v2162
          %v2164 = vpop.f32.mrb[0].mxu0
          %v2165 = vpop.f32.mrb[0].mxu0
          %v2166 = vadd.f32 0.0, %v2165
          %v2167 = vpop.f32.mrb[0].mxu0
          %2168 = vmatprep.mubr.bf16.mxu0 %v1873
          %2169 = vmatmul.mubr.bf16.gmra.mrb[0].mxu0 %v1872
          %v2170 = vpop.f32.mrb[0].mxu0
          %v2171 = vadd.f32 0.0, %v2170
          %v2172 = vpop.f32.mrb[0].mxu0
          %v2173 = vpop.f32.mrb[0].mxu0
          %v2174 = vadd.f32 0.0, %v2173
          %v2175 = vpop.f32.mrb[0].mxu0
          %2176 = vmatprep.mubr.bf16.mxu0 %v1875
          %2177 = vmatmul.mubr.bf16.gmra.mrb[0].mxu0 %v1874
          %v2178 = vpop.f32.mrb[0].mxu0
          %v2179 = vadd.f32 0.0, %v2178
          %v2180 = vpop.f32.mrb[0].mxu0
          %v2181 = vpop.f32.mrb[0].mxu0
          %v2182 = vadd.f32 0.0, %v2181
          %v2183 = vpop.f32.mrb[0].mxu0
          %2184 = vmatprep.mubr.bf16.mxu0 %v1877
          %2185 = vmatmul.mubr.bf16.gmra.mrb[0].mxu0 %v1876
          %v2186 = vpop.f32.mrb[0].mxu0
          %v2187 = vadd.f32 0.0, %v2186
          %v2188 = vpop.f32.mrb[0].mxu0
          %v2189 = vpop.f32.mrb[0].mxu0
          %v2190 = vadd.f32 0.0, %v2189
          %v2191 = vpop.f32.mrb[0].mxu0
          %2192 = vmatprep.mubr.bf16.mxu0 %v1879
          %2193 = vmatmul.mubr.bf16.gmra.mrb[0].mxu0 %v1878
          %v2194 = vpop.f32.mrb[0].mxu0
          %v2195 = vadd.f32 0.0, %v2194
          %v2196 = vpop.f32.mrb[0].mxu0
          %v2197 = vpop.f32.mrb[0].mxu0
          %v2198 = vadd.f32 0.0, %v2197
          %v2199 = vpop.f32.mrb[0].mxu0
          %2200 = vdwg.mxu0
          %v2201 = vadd.f32 %v1880, %v2075
          %v2202 = vadd.f32 %v1881, %v2078
          %v2203 = vadd.f32 %v1882, %v2083
          %v2204 = vadd.f32 %v1883, %v2086
          %v2205 = vadd.f32 %v1884, %v2091
          %v2206 = vadd.f32 %v1885, %v2094
          %v2207 = vadd.f32 %v1886, %v2099
          %v2208 = vadd.f32 %v1887, %v2102
          %v2209 = vadd.f32 %v1888, %v2107
          %v2210 = vadd.f32 %v1889, %v2110
          %v2211 = vadd.f32 %v1890, %v2115
          %v2212 = vadd.f32 %v1891, %v2118
          %v2213 = vadd.f32 %v1892, %v2123
          %v2214 = vadd.f32 %v1893, %v2126
          %v2215 = vadd.f32 %v1894, %v2131
          %v2216 = vadd.f32 %v1895, %v2134
          %v2217 = vadd.f32 %v1896, %v2139
          %v2218 = vadd.f32 %v1897, %v2142
          %v2219 = vadd.f32 %v1898, %v2147
          %v2220 = vadd.f32 %v1899, %v2150
          %v2221 = vadd.f32 %v1900, %v2155
          %v2222 = vadd.f32 %v1901, %v2158
          %v2223 = vadd.f32 %v1902, %v2163
          %v2224 = vadd.f32 %v1903, %v2166
          %v2225 = vadd.f32 %v1904, %v2171
          %v2226 = vadd.f32 %v1905, %v2174
          %v2227 = vadd.f32 %v1906, %v2179
          %v2228 = vadd.f32 %v1907, %v2182
          %v2229 = vadd.f32 %v1908, %v2187
          %v2230 = vadd.f32 %v1909, %v2190
          %v2231 = vadd.f32 %v1910, %v2195
          %v2232 = vadd.f32 %v1911, %v2198
          %2233 = vst [vmem:[#allocation2] sm:$0xff] %v2201
          %2234 = vst [vmem:[#allocation2 + $0x8] sm:$0xff] %v2202
          %2235 = vst [vmem:[#allocation2 + $0x10] sm:$0xff] %v2203
          %2236 = vst [vmem:[#allocation2 + $0x18] sm:$0xff] %v2204
          %2237 = vst [vmem:[#allocation2 + $0x20] sm:$0xff] %v2205
          %2238 = vst [vmem:[#allocation2 + $0x28] sm:$0xff] %v2206
          %2239 = vst [vmem:[#allocation2 + $0x30] sm:$0xff] %v2207
          %2240 = vst [vmem:[#allocation2 + $0x38] sm:$0xff] %v2208
          %2241 = vst [vmem:[#allocation2 + $0x40] sm:$0xff] %v2209
          %2242 = vst [vmem:[#allocation2 + $0x48] sm:$0xff] %v2210
          %2243 = vst [vmem:[#allocation2 + $0x50] sm:$0xff] %v2211
          %2244 = vst [vmem:[#allocation2 + $0x58] sm:$0xff] %v2212
          %2245 = vst [vmem:[#allocation2 + $0x60] sm:$0xff] %v2213
          %2246 = vst [vmem:[#allocation2 + $0x68] sm:$0xff] %v2214
          %2247 = vst [vmem:[#allocation2 + $0x70] sm:$0xff] %v2215
          %2248 = vst [vmem:[#allocation2 + $0x78] sm:$0xff] %v2216
          %2249 = vst [vmem:[#allocation2 + $0x80] sm:$0xff] %v2217
          %2250 = vst [vmem:[#allocation2 + $0x88] sm:$0xff] %v2218
          %2251 = vst [vmem:[#allocation2 + $0x90] sm:$0xff] %v2219
          %2252 = vst [vmem:[#allocation2 + $0x98] sm:$0xff] %v2220
          %2253 = vst [vmem:[#allocation2 + $0xa0] sm:$0xff] %v2221
          %2254 = vst [vmem:[#allocation2 + $0xa8] sm:$0xff] %v2222
          %2255 = vst [vmem:[#allocation2 + $0xb0] sm:$0xff] %v2223
          %2256 = vst [vmem:[#allocation2 + $0xb8] sm:$0xff] %v2224
          %2257 = vst [vmem:[#allocation2 + $0xc0] sm:$0xff] %v2225
          %2258 = vst [vmem:[#allocation2 + $0xc8] sm:$0xff] %v2226
          %2259 = vst [vmem:[#allocation2 + $0xd0] sm:$0xff] %v2227
          %2260 = vst [vmem:[#allocation2 + $0xd8] sm:$0xff] %v2228
          %2261 = vst [vmem:[#allocation2 + $0xe0] sm:$0xff] %v2229
          %2262 = vst [vmem:[#allocation2 + $0xe8] sm:$0xff] %v2230
          %2263 = vst [vmem:[#allocation2 + $0xf0] sm:$0xff] %v2231
          %2264 = vst [vmem:[#allocation2 + $0xf8] sm:$0xff] %v2232
        $region68: #{tpu_custom_call.1} parent=51 // pred_fallthru
          _
        // Predicated region
        $region69: #{tpu_custom_call.1} parent=51 // pred_check
          %p2265 = pneg %p560
        $region70: #{tpu_custom_call.1} parent=51 // pred_check_branch
          %2267 = sbr.rel (%p2265) target = $region72
        $region71: #{tpu_custom_call.1} parent=51 // pred_region
          %v2268 = vld [vmem:[#allocation2] sm:$0xff]
          %v2269 = vld [vmem:[#allocation2 + $0x8] sm:$0xff]
          %v2270 = vld [vmem:[#allocation2 + $0x10] sm:$0xff]
          %v2271 = vld [vmem:[#allocation2 + $0x18] sm:$0xff]
          %v2272 = vld [vmem:[#allocation2 + $0x20] sm:$0xff]
          %v2273 = vld [vmem:[#allocation2 + $0x28] sm:$0xff]
          %v2274 = vld [vmem:[#allocation2 + $0x30] sm:$0xff]
          %v2275 = vld [vmem:[#allocation2 + $0x38] sm:$0xff]
          %v2276 = vld [vmem:[#allocation2 + $0x40] sm:$0xff]
          %v2277 = vld [vmem:[#allocation2 + $0x48] sm:$0xff]
          %v2278 = vld [vmem:[#allocation2 + $0x50] sm:$0xff]
          %v2279 = vld [vmem:[#allocation2 + $0x58] sm:$0xff]
          %v2280 = vld [vmem:[#allocation2 + $0x60] sm:$0xff]
          %v2281 = vld [vmem:[#allocation2 + $0x68] sm:$0xff]
          %v2282 = vld [vmem:[#allocation2 + $0x70] sm:$0xff]
          %v2283 = vld [vmem:[#allocation2 + $0x78] sm:$0xff]
          %v2284 = vld [vmem:[#allocation2 + $0x80] sm:$0xff]
          %v2285 = vld [vmem:[#allocation2 + $0x88] sm:$0xff]
          %v2286 = vld [vmem:[#allocation2 + $0x90] sm:$0xff]
          %v2287 = vld [vmem:[#allocation2 + $0x98] sm:$0xff]
          %v2288 = vld [vmem:[#allocation2 + $0xa0] sm:$0xff]
          %v2289 = vld [vmem:[#allocation2 + $0xa8] sm:$0xff]
          %v2290 = vld [vmem:[#allocation2 + $0xb0] sm:$0xff]
          %v2291 = vld [vmem:[#allocation2 + $0xb8] sm:$0xff]
          %v2292 = vld [vmem:[#allocation2 + $0xc0] sm:$0xff]
          %v2293 = vld [vmem:[#allocation2 + $0xc8] sm:$0xff]
          %v2294 = vld [vmem:[#allocation2 + $0xd0] sm:$0xff]
          %v2295 = vld [vmem:[#allocation2 + $0xd8] sm:$0xff]
          %v2296 = vld [vmem:[#allocation2 + $0xe0] sm:$0xff]
          %v2297 = vld [vmem:[#allocation2 + $0xe8] sm:$0xff]
          %v2298 = vld [vmem:[#allocation2 + $0xf0] sm:$0xff]
          %v2299 = vld [vmem:[#allocation2 + $0xf8] sm:$0xff]
          %v2300 = vld [vmem:[%s556] sm:$0x1]
          %v2302 = vlaneseq
          %v2303 = vshrl.u32 %v2302, 7
          %v2304 = vsub.s32 0, %v2303
          %v2305 = vrot.slane %v2300, %v2304
          %v2307 = vadd.f32 %v2268, %v2305
          %v2308 = vadd.f32 %v2269, %v2305
          %v2309 = vadd.f32 %v2270, %v2305
          %v2310 = vadd.f32 %v2271, %v2305
          %v2311 = vadd.f32 %v2272, %v2305
          %v2312 = vadd.f32 %v2273, %v2305
          %v2313 = vadd.f32 %v2274, %v2305
          %v2314 = vadd.f32 %v2275, %v2305
          %v2315 = vadd.f32 %v2276, %v2305
          %v2316 = vadd.f32 %v2277, %v2305
          %v2317 = vadd.f32 %v2278, %v2305
          %v2318 = vadd.f32 %v2279, %v2305
          %v2319 = vadd.f32 %v2280, %v2305
          %v2320 = vadd.f32 %v2281, %v2305
          %v2321 = vadd.f32 %v2282, %v2305
          %v2322 = vadd.f32 %v2283, %v2305
          %v2323 = vadd.f32 %v2284, %v2305
          %v2324 = vadd.f32 %v2285, %v2305
          %v2325 = vadd.f32 %v2286, %v2305
          %v2326 = vadd.f32 %v2287, %v2305
          %v2327 = vadd.f32 %v2288, %v2305
          %v2328 = vadd.f32 %v2289, %v2305
          %v2329 = vadd.f32 %v2290, %v2305
          %v2330 = vadd.f32 %v2291, %v2305
          %v2331 = vadd.f32 %v2292, %v2305
          %v2332 = vadd.f32 %v2293, %v2305
          %v2333 = vadd.f32 %v2294, %v2305
          %v2334 = vadd.f32 %v2295, %v2305
          %v2335 = vadd.f32 %v2296, %v2305
          %v2336 = vadd.f32 %v2297, %v2305
          %v2337 = vadd.f32 %v2298, %v2305
          %v2338 = vadd.f32 %v2299, %v2305
          %v2339 = vld [vmem:[%s523] sm:$0xff]
          %v2340 = vld [vmem:[%s523 + $0x8] sm:$0xff]
          %v2341 = vld [vmem:[%s523 + $0x10] sm:$0xff]
          %v2342 = vld [vmem:[%s523 + $0x18] sm:$0xff]
          %v2343 = vld [vmem:[%s523 + $0x20] sm:$0xff]
          %v2344 = vld [vmem:[%s523 + $0x28] sm:$0xff]
          %v2345 = vld [vmem:[%s523 + $0x30] sm:$0xff]
          %v2346 = vld [vmem:[%s523 + $0x38] sm:$0xff]
          %v2347 = vld [vmem:[%s523 + $0x40] sm:$0xff]
          %v2348 = vld [vmem:[%s523 + $0x48] sm:$0xff]
          %v2349 = vld [vmem:[%s523 + $0x50] sm:$0xff]
          %v2350 = vld [vmem:[%s523 + $0x58] sm:$0xff]
          %v2351 = vld [vmem:[%s523 + $0x60] sm:$0xff]
          %v2352 = vld [vmem:[%s523 + $0x68] sm:$0xff]
          %v2353 = vld [vmem:[%s523 + $0x70] sm:$0xff]
          %v2354 = vld [vmem:[%s523 + $0x78] sm:$0xff]
          %v2355 = vld [vmem:[%s523 + $0x80] sm:$0xff]
          %v2356 = vld [vmem:[%s523 + $0x88] sm:$0xff]
          %v2357 = vld [vmem:[%s523 + $0x90] sm:$0xff]
          %v2358 = vld [vmem:[%s523 + $0x98] sm:$0xff]
          %v2359 = vld [vmem:[%s523 + $0xa0] sm:$0xff]
          %v2360 = vld [vmem:[%s523 + $0xa8] sm:$0xff]
          %v2361 = vld [vmem:[%s523 + $0xb0] sm:$0xff]
          %v2362 = vld [vmem:[%s523 + $0xb8] sm:$0xff]
          %v2363 = vld [vmem:[%s523 + $0xc0] sm:$0xff]
          %v2364 = vld [vmem:[%s523 + $0xc8] sm:$0xff]
          %v2365 = vld [vmem:[%s523 + $0xd0] sm:$0xff]
          %v2366 = vld [vmem:[%s523 + $0xd8] sm:$0xff]
          %v2367 = vld [vmem:[%s523 + $0xe0] sm:$0xff]
          %v2368 = vld [vmem:[%s523 + $0xe8] sm:$0xff]
          %v2369 = vld [vmem:[%s523 + $0xf0] sm:$0xff]
          %v2370 = vld [vmem:[%s523 + $0xf8] sm:$0xff]
          %2372 = vset.pattern.permute.xlu0 0
          %2373 = vperm.xlu0 %2372, %v2339
          %v2374 = vpop.permute.xlu0 %2373
          %2377 = vset.pattern.permute.xlu0 0
          %2378 = vperm.xlu0 %2377, %v2340
          %v2379 = vpop.permute.xlu0 %2378
          %2382 = vset.pattern.permute.xlu0 0
          %2383 = vperm.xlu0 %2382, %v2341
          %v2384 = vpop.permute.xlu0 %2383
          %2387 = vset.pattern.permute.xlu0 0
          %2388 = vperm.xlu0 %2387, %v2342
          %v2389 = vpop.permute.xlu0 %2388
          %2392 = vset.pattern.permute.xlu0 0
          %2393 = vperm.xlu0 %2392, %v2343
          %v2394 = vpop.permute.xlu0 %2393
          %2397 = vset.pattern.permute.xlu0 0
          %2398 = vperm.xlu0 %2397, %v2344
          %v2399 = vpop.permute.xlu0 %2398
          %2402 = vset.pattern.permute.xlu0 0
          %2403 = vperm.xlu0 %2402, %v2345
          %v2404 = vpop.permute.xlu0 %2403
          %2407 = vset.pattern.permute.xlu0 0
          %2408 = vperm.xlu0 %2407, %v2346
          %v2409 = vpop.permute.xlu0 %2408
          %2412 = vset.pattern.permute.xlu0 0
          %2413 = vperm.xlu0 %2412, %v2347
          %v2414 = vpop.permute.xlu0 %2413
          %2417 = vset.pattern.permute.xlu0 0
          %2418 = vperm.xlu0 %2417, %v2348
          %v2419 = vpop.permute.xlu0 %2418
          %2422 = vset.pattern.permute.xlu0 0
          %2423 = vperm.xlu0 %2422, %v2349
          %v2424 = vpop.permute.xlu0 %2423
          %2427 = vset.pattern.permute.xlu0 0
          %2428 = vperm.xlu0 %2427, %v2350
          %v2429 = vpop.permute.xlu0 %2428
          %2432 = vset.pattern.permute.xlu0 0
          %2433 = vperm.xlu0 %2432, %v2351
          %v2434 = vpop.permute.xlu0 %2433
          %2437 = vset.pattern.permute.xlu0 0
          %2438 = vperm.xlu0 %2437, %v2352
          %v2439 = vpop.permute.xlu0 %2438
          %2442 = vset.pattern.permute.xlu0 0
          %2443 = vperm.xlu0 %2442, %v2353
          %v2444 = vpop.permute.xlu0 %2443
          %2447 = vset.pattern.permute.xlu0 0
          %2448 = vperm.xlu0 %2447, %v2354
          %v2449 = vpop.permute.xlu0 %2448
          %2452 = vset.pattern.permute.xlu0 0
          %2453 = vperm.xlu0 %2452, %v2355
          %v2454 = vpop.permute.xlu0 %2453
          %2457 = vset.pattern.permute.xlu0 0
          %2458 = vperm.xlu0 %2457, %v2356
          %v2459 = vpop.permute.xlu0 %2458
          %2462 = vset.pattern.permute.xlu0 0
          %2463 = vperm.xlu0 %2462, %v2357
          %v2464 = vpop.permute.xlu0 %2463
          %2467 = vset.pattern.permute.xlu0 0
          %2468 = vperm.xlu0 %2467, %v2358
          %v2469 = vpop.permute.xlu0 %2468
          %2472 = vset.pattern.permute.xlu0 0
          %2473 = vperm.xlu0 %2472, %v2359
          %v2474 = vpop.permute.xlu0 %2473
          %2477 = vset.pattern.permute.xlu0 0
          %2478 = vperm.xlu0 %2477, %v2360
          %v2479 = vpop.permute.xlu0 %2478
          %2482 = vset.pattern.permute.xlu0 0
          %2483 = vperm.xlu0 %2482, %v2361
          %v2484 = vpop.permute.xlu0 %2483
          %2487 = vset.pattern.permute.xlu0 0
          %2488 = vperm.xlu0 %2487, %v2362
          %v2489 = vpop.permute.xlu0 %2488
          %2492 = vset.pattern.permute.xlu0 0
          %2493 = vperm.xlu0 %2492, %v2363
          %v2494 = vpop.permute.xlu0 %2493
          %2497 = vset.pattern.permute.xlu0 0
          %2498 = vperm.xlu0 %2497, %v2364
          %v2499 = vpop.permute.xlu0 %2498
          %2502 = vset.pattern.permute.xlu0 0
          %2503 = vperm.xlu0 %2502, %v2365
          %v2504 = vpop.permute.xlu0 %2503
          %2507 = vset.pattern.permute.xlu0 0
          %2508 = vperm.xlu0 %2507, %v2366
          %v2509 = vpop.permute.xlu0 %2508
          %2512 = vset.pattern.permute.xlu0 0
          %2513 = vperm.xlu0 %2512, %v2367
          %v2514 = vpop.permute.xlu0 %2513
          %2517 = vset.pattern.permute.xlu0 0
          %2518 = vperm.xlu0 %2517, %v2368
          %v2519 = vpop.permute.xlu0 %2518
          %2522 = vset.pattern.permute.xlu0 0
          %2523 = vperm.xlu0 %2522, %v2369
          %v2524 = vpop.permute.xlu0 %2523
          %2527 = vset.pattern.permute.xlu0 0
          %2528 = vperm.xlu0 %2527, %v2370
          %v2529 = vpop.permute.xlu0 %2528
          %v2531 = vmul.f32 %v2307, %v2374
          %v2532 = vmul.f32 %v2308, %v2379
          %v2533 = vmul.f32 %v2309, %v2384
          %v2534 = vmul.f32 %v2310, %v2389
          %v2535 = vmul.f32 %v2311, %v2394
          %v2536 = vmul.f32 %v2312, %v2399
          %v2537 = vmul.f32 %v2313, %v2404
          %v2538 = vmul.f32 %v2314, %v2409
          %v2539 = vmul.f32 %v2315, %v2414
          %v2540 = vmul.f32 %v2316, %v2419
          %v2541 = vmul.f32 %v2317, %v2424
          %v2542 = vmul.f32 %v2318, %v2429
          %v2543 = vmul.f32 %v2319, %v2434
          %v2544 = vmul.f32 %v2320, %v2439
          %v2545 = vmul.f32 %v2321, %v2444
          %v2546 = vmul.f32 %v2322, %v2449
          %v2547 = vmul.f32 %v2323, %v2454
          %v2548 = vmul.f32 %v2324, %v2459
          %v2549 = vmul.f32 %v2325, %v2464
          %v2550 = vmul.f32 %v2326, %v2469
          %v2551 = vmul.f32 %v2327, %v2474
          %v2552 = vmul.f32 %v2328, %v2479
          %v2553 = vmul.f32 %v2329, %v2484
          %v2554 = vmul.f32 %v2330, %v2489
          %v2555 = vmul.f32 %v2331, %v2494
          %v2556 = vmul.f32 %v2332, %v2499
          %v2557 = vmul.f32 %v2333, %v2504
          %v2558 = vmul.f32 %v2334, %v2509
          %v2559 = vmul.f32 %v2335, %v2514
          %v2560 = vmul.f32 %v2336, %v2519
          %v2561 = vmul.f32 %v2337, %v2524
          %v2562 = vmul.f32 %v2338, %v2529
          %v2563 = vpack.c.bf16 %v2532, %v2531
          %v2564 = vpack.c.bf16 %v2534, %v2533
          %v2565 = vpack.c.bf16 %v2536, %v2535
          %v2566 = vpack.c.bf16 %v2538, %v2537
          %v2567 = vpack.c.bf16 %v2540, %v2539
          %v2568 = vpack.c.bf16 %v2542, %v2541
          %v2569 = vpack.c.bf16 %v2544, %v2543
          %v2570 = vpack.c.bf16 %v2546, %v2545
          %v2571 = vpack.c.bf16 %v2548, %v2547
          %v2572 = vpack.c.bf16 %v2550, %v2549
          %v2573 = vpack.c.bf16 %v2552, %v2551
          %v2574 = vpack.c.bf16 %v2554, %v2553
          %v2575 = vpack.c.bf16 %v2556, %v2555
          %v2576 = vpack.c.bf16 %v2558, %v2557
          %v2577 = vpack.c.bf16 %v2560, %v2559
          %v2578 = vpack.c.bf16 %v2562, %v2561
          %v2595 = vunpack.c.l.b16 %v2563
          %v2596 = vunpack.c.h.b16 %v2563
          %v2597 = vunpack.c.l.b16 %v2564
          %v2598 = vunpack.c.h.b16 %v2564
          %v2599 = vunpack.c.l.b16 %v2565
          %v2600 = vunpack.c.h.b16 %v2565
          %v2601 = vunpack.c.l.b16 %v2566
          %v2602 = vunpack.c.h.b16 %v2566
          %v2603 = vunpack.c.l.b16 %v2567
          %v2604 = vunpack.c.h.b16 %v2567
          %v2605 = vunpack.c.l.b16 %v2568
          %v2606 = vunpack.c.h.b16 %v2568
          %v2607 = vunpack.c.l.b16 %v2569
          %v2608 = vunpack.c.h.b16 %v2569
          %v2609 = vunpack.c.l.b16 %v2570
          %v2610 = vunpack.c.h.b16 %v2570
          %v2611 = vunpack.c.l.b16 %v2571
          %v2612 = vunpack.c.h.b16 %v2571
          %v2613 = vunpack.c.l.b16 %v2572
          %v2614 = vunpack.c.h.b16 %v2572
          %v2615 = vunpack.c.l.b16 %v2573
          %v2616 = vunpack.c.h.b16 %v2573
          %v2617 = vunpack.c.l.b16 %v2574
          %v2618 = vunpack.c.h.b16 %v2574
          %v2619 = vunpack.c.l.b16 %v2575
          %v2620 = vunpack.c.h.b16 %v2575
          %v2621 = vunpack.c.l.b16 %v2576
          %v2622 = vunpack.c.h.b16 %v2576
          %v2623 = vunpack.c.l.b16 %v2577
          %v2624 = vunpack.c.h.b16 %v2577
          %v2625 = vunpack.c.l.b16 %v2578
          %v2626 = vunpack.c.h.b16 %v2578
          %v2627 = vpack.c.b16 %v2595, %v2595
          %v2628 = vpack.c.b16 %v2596, %v2596
          %v2629 = vpack.c.b16 %v2597, %v2597
          %v2630 = vpack.c.b16 %v2598, %v2598
          %v2631 = vpack.c.b16 %v2599, %v2599
          %v2632 = vpack.c.b16 %v2600, %v2600
          %v2633 = vpack.c.b16 %v2601, %v2601
          %v2634 = vpack.c.b16 %v2602, %v2602
          %v2635 = vpack.c.b16 %v2603, %v2603
          %v2636 = vpack.c.b16 %v2604, %v2604
          %v2637 = vpack.c.b16 %v2605, %v2605
          %v2638 = vpack.c.b16 %v2606, %v2606
          %v2639 = vpack.c.b16 %v2607, %v2607
          %v2640 = vpack.c.b16 %v2608, %v2608
          %v2641 = vpack.c.b16 %v2609, %v2609
          %v2642 = vpack.c.b16 %v2610, %v2610
          %v2643 = vpack.c.b16 %v2611, %v2611
          %v2644 = vpack.c.b16 %v2612, %v2612
          %v2645 = vpack.c.b16 %v2613, %v2613
          %v2646 = vpack.c.b16 %v2614, %v2614
          %v2647 = vpack.c.b16 %v2615, %v2615
          %v2648 = vpack.c.b16 %v2616, %v2616
          %v2649 = vpack.c.b16 %v2617, %v2617
          %v2650 = vpack.c.b16 %v2618, %v2618
          %v2651 = vpack.c.b16 %v2619, %v2619
          %v2652 = vpack.c.b16 %v2620, %v2620
          %v2653 = vpack.c.b16 %v2621, %v2621
          %v2654 = vpack.c.b16 %v2622, %v2622
          %v2655 = vpack.c.b16 %v2623, %v2623
          %v2656 = vpack.c.b16 %v2624, %v2624
          %v2657 = vpack.c.b16 %v2625, %v2625
          %v2658 = vpack.c.b16 %v2626, %v2626
          %2691 = vst [vmem:[%s512] sm:$0xf] %v2627
          %2692 = vst [vmem:[%s512 + $0x4] sm:$0xf] %v2628
          %2693 = vst [vmem:[%s512 + $0x8] sm:$0xf] %v2629
          %2694 = vst [vmem:[%s512 + $0xc] sm:$0xf] %v2630
          %2695 = vst [vmem:[%s512 + $0x10] sm:$0xf] %v2631
          %2696 = vst [vmem:[%s512 + $0x14] sm:$0xf] %v2632
          %2697 = vst [vmem:[%s512 + $0x18] sm:$0xf] %v2633
          %2698 = vst [vmem:[%s512 + $0x1c] sm:$0xf] %v2634
          %2699 = vst [vmem:[%s512 + $0x20] sm:$0xf] %v2635
          %2700 = vst [vmem:[%s512 + $0x24] sm:$0xf] %v2636
          %2701 = vst [vmem:[%s512 + $0x28] sm:$0xf] %v2637
          %2702 = vst [vmem:[%s512 + $0x2c] sm:$0xf] %v2638
          %2703 = vst [vmem:[%s512 + $0x30] sm:$0xf] %v2639
          %2704 = vst [vmem:[%s512 + $0x34] sm:$0xf] %v2640
          %2705 = vst [vmem:[%s512 + $0x38] sm:$0xf] %v2641
          %2706 = vst [vmem:[%s512 + $0x3c] sm:$0xf] %v2642
          %2707 = vst [vmem:[%s512 + $0x40] sm:$0xf] %v2643
          %2708 = vst [vmem:[%s512 + $0x44] sm:$0xf] %v2644
          %2709 = vst [vmem:[%s512 + $0x48] sm:$0xf] %v2645
          %2710 = vst [vmem:[%s512 + $0x4c] sm:$0xf] %v2646
          %2711 = vst [vmem:[%s512 + $0x50] sm:$0xf] %v2647
          %2712 = vst [vmem:[%s512 + $0x54] sm:$0xf] %v2648
          %2713 = vst [vmem:[%s512 + $0x58] sm:$0xf] %v2649
          %2714 = vst [vmem:[%s512 + $0x5c] sm:$0xf] %v2650
          %2715 = vst [vmem:[%s512 + $0x60] sm:$0xf] %v2651
          %2716 = vst [vmem:[%s512 + $0x64] sm:$0xf] %v2652
          %2717 = vst [vmem:[%s512 + $0x68] sm:$0xf] %v2653
          %2718 = vst [vmem:[%s512 + $0x6c] sm:$0xf] %v2654
          %2719 = vst [vmem:[%s512 + $0x70] sm:$0xf] %v2655
          %2720 = vst [vmem:[%s512 + $0x74] sm:$0xf] %v2656
          %2721 = vst [vmem:[%s512 + $0x78] sm:$0xf] %v2657
          %2722 = vst [vmem:[%s512 + $0x7c] sm:$0xf] %v2658
        $region72: #{tpu_custom_call.1} parent=51 // pred_fallthru
          _
        %s2723 = sand.u32 %s282, 1
        %s2724 = scalar_lea.sflag [#allocation8], %s2723
        %s2725 = sand.u32 %s282, 1
        %s2726 = smul.addr %s2725, 128
        %s2727 = scalar_lea.vmem [#allocation11], %s2726
        // Predicated region
        $region73: #{tpu_custom_call.1} parent=51 // pred_check
          %p2728 = pneg %p292
        $region74: #{tpu_custom_call.1} parent=51 // pred_check_branch
          %2730 = sbr.rel (%p2728) target = $region76
        $region75: #{tpu_custom_call.1} parent=51 // pred_region
          %s2731 = smul.u32 32, %s40
          %s2733 = ssub.s32 2048, 2048
          %2734 = vsyncadd %s2724, %s2733
          %s2735 = smul.addr %s2731, 64
          %s2736 = scalar_lea.hbm %s10, %s2735
          %s2737 = sshll.u32 %s2727, 4
          %s2738 = int_to_ptr.vmem [resolvable:$true] %s2737
          %2743 = dma.vmem_to_hbm [thread:$0]  %s2738, 2048, %s2736, %s2724, 64, 64, 4
        $region76: #{tpu_custom_call.1} parent=51 // pred_fallthru
          _
      $region52: #{tpu_custom_call.1} parent=5 // pred_fallthru
        _
      %p2744 = scmp.le.s32.totalorder 2, %s31
      // Predicated region
      $region77: #{tpu_custom_call.1} parent=5 // pred_check
        %p2745 = pneg %p2744
      $region78: #{tpu_custom_call.1} parent=5 // pred_check_branch
        %2747 = sbr.rel (%p2745) target = $region80
      $region79: #{tpu_custom_call.1} parent=5 // pred_region
        %s2748 = ssub.s32 %s31, 2
        // Predicated region
        $region81: #{tpu_custom_call.1} parent=79 // pred_check
          %p2749 = pneg %p298
        $region82: #{tpu_custom_call.1} parent=79 // pred_check_branch
          %2751 = sbr.rel (%p2749) target = $region84
        $region83: #{tpu_custom_call.1} parent=79 // pred_region
          %s2752 = sand.u32 %s283, 1
          %s2753 = scalar_lea.sflag [#allocation8], %s2752
          %s2754 = sand.u32 %s283, 1
          %s2755 = smul.addr %s2754, 128
          %s2756 = scalar_lea.vmem [#allocation11], %s2755
          %2757 = dma.done %s2753, 2048
        $region84: #{tpu_custom_call.1} parent=79 // pred_fallthru
          _
      $region80: #{tpu_custom_call.1} parent=5 // pred_fallthru
        _
    $region6: #{tpu_custom_call.1} parent=1 // loop_footer
      %s35 = sadd.s32 1, %s31
    $region7: #{tpu_custom_call.1} parent=1 // loop_footer_branch
      %30 = sbr.rel target = $region3
    $region8: #{tpu_custom_call.1} parent=1 // loop_exit
      _
    %2758 = vsyncpa [#allocation7], 1
    %s2759 = scalar_lea.sflag [#allocation7], 1
    %2760 = vsyncpa %s2759, 1
    %2761 = vsyncpa [#allocation10], 1
    %s2762 = scalar_lea.sflag [#allocation10], 1
    %2763 = vsyncpa %s2762, 1
    %2764 = vsyncpa [#allocation8], 1
    %s2765 = scalar_lea.sflag [#allocation8], 1
    %2766 = vsyncpa %s2765, 1

</llo_original>
